<compile_context>
chip_gen: v5e
topology: v5e:2x2
jax: 0.10.0
libtpu: 0.0.40
codegen_flags: <defaults>
</compile_context>

<pallas_src>
import functools
import math

import jax
import jax.numpy as jnp
from jax.experimental import pallas as pl
from jax.experimental.pallas import tpu as pltpu

# ----------------------------- model config (small) ------------------------------
VOCAB      = 64
HIDDEN     = 32
NUM_LAYERS = 2
NUM_HEADS  = 4
HEAD_DIM   = HIDDEN // NUM_HEADS          # 8
INTER      = 64
MAX_POS    = 64
TYPE_VOCAB = 2
N_CLASSES  = 3
LN_EPS     = 1e-12                        # BERT default

VMEM_LIMIT = 48 * 1024 * 1024             # v7x-safe (64 MiB physical); plenty on v5e/v6e


# --------------------------------- helpers ---------------------------------------
def _tile(dim, target, align=8):
    """Largest align-multiple tile <= target that evenly divides dim (full dim if small)."""
    if dim <= target:
        return dim
    t = (target // align) * align
    while t >= align:
        if dim % t == 0:
            return t
        t -= align
    # TODO(synk): pathological non-divisible dims should be padded upstream instead.
    return dim


def _gelu(x):
    # TODO(synk): HF BERT 'gelu' is erf-based; tanh approximation used (Mosaic-safe EUP op).
    return 0.5 * x * (1.0 + jnp.tanh(0.7978845608028654 * (x + 0.044715 * x * x * x)))


def _apply_act(y, activation):
    if activation == "gelu":
        return _gelu(y)
    if activation == "tanh":
        return jnp.tanh(y)
    return y


def _ln(y, g, b, eps):
    mean = jnp.mean(y, axis=-1, keepdims=True)
    yc = y - mean
    var = jnp.mean(yc * yc, axis=-1, keepdims=True)
    return (yc * jax.lax.rsqrt(var + eps)) * g + b


# --------------------------------- Pallas kernels --------------------------------
def _ln_kernel(x_ref, g_ref, b_ref, o_ref, *, eps):
    """o = LayerNorm(x) * gamma + beta (bf16 in, LN stats in f32)."""
    x = x_ref[...].astype(jnp.float32)
    o_ref[...] = _ln(x, g_ref[...], b_ref[...], eps).astype(o_ref.dtype)


def _qkv_kernel(x_ref, w_ref, b_ref, q_ref, k_ref, v_ref):
    """One MXU call against the resident [K,3H] weight; split into q/k/v outputs."""
    y = jnp.dot(x_ref[...], w_ref[...], preferred_element_type=jnp.float32) + b_ref[...]
    h = q_ref.shape[-1]
    q_ref[...] = y[:, 0 * h:1 * h].astype(q_ref.dtype)
    k_ref[...] = y[:, 1 * h:2 * h].astype(k_ref.dtype)
    v_ref[...] = y[:, 2 * h:3 * h].astype(v_ref.dtype)


def _mm_ln_kernel(x_ref, w_ref, b_ref, res_ref, g_ref, beta_ref, o_ref, *, activation, eps):
    """y = LayerNorm(act(x @ w + b) + residual) * gamma + beta; w is a resident full-K block."""
    y = jnp.dot(x_ref[...], w_ref[...], preferred_element_type=jnp.float32) + b_ref[...]
    y = _apply_act(y, activation) + res_ref[...].astype(jnp.float32)
    o_ref[...] = _ln(y, g_ref[...], beta_ref[...], eps).astype(o_ref.dtype)


def _ffn_kernel(x_ref, wi_ref, bi_ref, wf_ref, bf_ref, g_ref, beta_ref, o_ref, acc_ref,
                *, eps):
    """Fused FFN: LN(gelu(x@wi+bi) @ wf + bf + x), grid reduction over the intermediate dim.

    x_ref doubles as the residual (same (i, 0) block, resident across the reduction)."""
    j = pl.program_id(1)

    @pl.when(j == 0)
    def _():
        acc_ref[...] = jnp.zeros_like(acc_ref)

    h = jnp.dot(x_ref[...], wi_ref[...], preferred_element_type=jnp.float32) + bi_ref[...]
    h = _gelu(h)                                             # f32 elementwise (v5e-safe)
    acc_ref[...] += jnp.dot(h.astype(jnp.bfloat16), wf_ref[...],
                            preferred_element_type=jnp.float32)

    @pl.when(j == pl.num_programs(1) - 1)
    def _():
        y = acc_ref[...] + bf_ref[...] + x_ref[...].astype(jnp.float32)
        o_ref[...] = _ln(y, g_ref[...], beta_ref[...], eps).astype(o_ref.dtype)


def _flash_kernel(bias_ref, q_ref, k_ref, v_ref, o_ref, m_sc, l_sc, acc_sc,
                  *, num_heads, head_dim, scale):
    """Flash attention for one (batch, q-tile): heads unrolled in-kernel, online softmax
    over KV tiles, lane-dense [tq, H] output store.

    q_ref:[tq,H]  k_ref/v_ref:[tkv,H]  bias_ref:[1,tkv] additive mask  o_ref:[tq,H]."""
    ki = pl.program_id(2)

    @pl.when(ki == 0)
    def _():
        m_sc[...] = jnp.full_like(m_sc, -1e30)
        l_sc[...] = jnp.zeros_like(l_sc)
        acc_sc[...] = jnp.zeros_like(acc_sc)

    bias = bias_ref[...]                                     # [1, tkv] f32

    for h in range(num_heads):                               # static unroll, 2-D ops only
        sl = slice(h * head_dim, (h + 1) * head_dim)
        q_h = q_ref[:, sl] * scale                           # scale q (tkv/D x smaller than s)
        k_h = k_ref[:, sl]
        v_h = v_ref[:, sl]

        s = jax.lax.dot_general(q_h, k_h, (((1,), (1,)), ((), ())),
                                preferred_element_type=jnp.float32)   # [tq, tkv]
        s = s + bias

        m_prev = m_sc[h]                                     # [tq, 1]
        m_new = jnp.maximum(m_prev, jnp.max(s, axis=-1, keepdims=True))
        alpha = jnp.exp(m_prev - m_new)
        # TODO(synk): on v6e/v7x p could be computed in bf16 (EUP-bound); f32 kept for v5e.
        p = jnp.exp(s - m_new)
        l_sc[h] = alpha * l_sc[h] + jnp.sum(p, axis=-1, keepdims=True)
        acc_sc[h] = alpha * acc_sc[h] + jnp.dot(p.astype(v_h.dtype), v_h,
                                                preferred_element_type=jnp.float32)
        m_sc[h] = m_new

    @pl.when(ki == pl.num_programs(2) - 1)
    def _():
        for h in range(num_heads):
            inv = pl.reciprocal(l_sc[h], approx=True)        # EUP, off the VALU slot
            o_ref[:, h * head_dim:(h + 1) * head_dim] = (acc_sc[h] * inv).astype(o_ref.dtype)


# --------------------------------- kernel wrappers --------------------------------
def layernorm(x, gamma, beta, *, eps=LN_EPS, out_dtype=jnp.bfloat16, tm_target=1024):
    M, H = x.shape
    tm = _tile(M, tm_target)
    return pl.pallas_call(
        functools.partial(_ln_kernel, eps=eps),
        out_shape=jax.ShapeDtypeStruct((M, H), out_dtype),
        grid=(M // tm,),
        in_specs=[pl.BlockSpec((tm, H), lambda i: (i, 0)),
                  pl.BlockSpec((1, H), lambda i: (0, 0)),
                  pl.BlockSpec((1, H), lambda i: (0, 0))],
        out_specs=pl.BlockSpec((tm, H), lambda i: (i, 0)),
        compiler_params=pltpu.CompilerParams(dimension_semantics=("parallel",),
                                             vmem_limit_bytes=VMEM_LIMIT),
    )(x.astype(jnp.bfloat16),                                # bf16 in halves HBM read bytes
      gamma.reshape(1, H).astype(jnp.float32),
      beta.reshape(1, H).astype(jnp.float32))


def qkv_project(x, w_qkv, b_qkv, *, out_dtype=jnp.bfloat16, tm_target=1024):
    """(q, k, v) = split(x @ w_qkv + b_qkv); w_qkv ([K,3H]) stays VMEM-resident."""
    M, K = x.shape
    N3 = w_qkv.shape[1]
    H = N3 // 3
    tm = _tile(M, tm_target)
    out_sds = jax.ShapeDtypeStruct((M, H), out_dtype)
    out_spec = pl.BlockSpec((tm, H), lambda i: (i, 0))
    return pl.pallas_call(
        _qkv_kernel,
        out_shape=(out_sds, out_sds, out_sds),
        grid=(M // tm,),
        in_specs=[pl.BlockSpec((tm, K), lambda i: (i, 0)),
                  pl.BlockSpec((K, N3), lambda i: (0, 0)),   # grid-invariant -> DMA'd once
                  pl.BlockSpec((1, N3), lambda i: (0, 0))],
        out_specs=(out_spec, out_spec, out_spec),
        compiler_params=pltpu.CompilerParams(dimension_semantics=("parallel",),
                                             vmem_limit_bytes=VMEM_LIMIT),
    )(x.astype(jnp.bfloat16), w_qkv.astype(jnp.bfloat16),
      b_qkv.reshape(1, N3).astype(jnp.float32))


def linear_residual_ln(x, w, b, *, residual, gamma, beta, activation="none",
                       eps=LN_EPS, out_dtype=jnp.bfloat16, tm_target=1024):
    """LayerNorm(act(x @ w + b) + residual); w ([K,N]) stays VMEM-resident."""
    M, K = x.shape
    N = w.shape[1]
    tm = _tile(M, tm_target)
    return pl.pallas_call(
        functools.partial(_mm_ln_kernel, activation=activation, eps=eps),
        out_shape=jax.ShapeDtypeStruct((M, N), out_dtype),
        grid=(M // tm,),
        in_specs=[pl.BlockSpec((tm, K), lambda i: (i, 0)),
                  pl.BlockSpec((K, N), lambda i: (0, 0)),    # resident weight
                  pl.BlockSpec((1, N), lambda i: (0, 0)),
                  pl.BlockSpec((tm, N), lambda i: (i, 0)),   # residual
                  pl.BlockSpec((1, N), lambda i: (0, 0)),
                  pl.BlockSpec((1, N), lambda i: (0, 0))],
        out_specs=pl.BlockSpec((tm, N), lambda i: (i, 0)),
        compiler_params=pltpu.CompilerParams(dimension_semantics=("parallel",),
                                             vmem_limit_bytes=VMEM_LIMIT),
    )(x.astype(jnp.bfloat16), w.astype(jnp.bfloat16), b.reshape(1, N).astype(jnp.float32),
      residual.astype(jnp.bfloat16),
      gamma.reshape(1, N).astype(jnp.float32),
      beta.reshape(1, N).astype(jnp.float32))


def ffn_fused(x, wi, bi, wf, bf, gamma, beta, *, eps=LN_EPS, out_dtype=jnp.bfloat16,
              tm_target=1024, ti_target=512):
    """LayerNorm(gelu(x @ wi + bi) @ wf + bf + x); wi/wf streamed in ti-wide chunks."""
    M, H = x.shape
    I = wi.shape[1]
    tm = _tile(M, tm_target)
    ti = _tile(I, ti_target)
    grid = (M // tm, I // ti)
    # TODO(synk): if xprof shows exposed DMA in the reduction loop, add
    # pipeline_mode=pl.Buffered(3) on the wi/wf chunk BlockSpecs (skip on v7x if VMEM-tight).
    return pl.pallas_call(
        functools.partial(_ffn_kernel, eps=eps),
        out_shape=jax.ShapeDtypeStruct((M, H), out_dtype),
        grid=grid,
        in_specs=[
            pl.BlockSpec((tm, H), lambda i, j: (i, 0)),      # x (also the residual), resident per i
            pl.BlockSpec((H, ti), lambda i, j: (0, j)),      # wi chunk
            pl.BlockSpec((1, ti), lambda i, j: (0, j)),      # bi chunk
            pl.BlockSpec((ti, H), lambda i, j: (j, 0)),      # wf chunk
            pl.BlockSpec((1, H), lambda i, j: (0, 0)),       # bf
            pl.BlockSpec((1, H), lambda i, j: (0, 0)),       # gamma
            pl.BlockSpec((1, H), lambda i, j: (0, 0)),       # beta
        ],
        out_specs=pl.BlockSpec((tm, H), lambda i, j: (i, 0)),
        scratch_shapes=[pltpu.VMEM((tm, H), jnp.float32)],
        compiler_params=pltpu.CompilerParams(
            dimension_semantics=("parallel", "arbitrary"),
            vmem_limit_bytes=VMEM_LIMIT),
    )(x.astype(jnp.bfloat16), wi.astype(jnp.bfloat16),
      bi.reshape(1, I).astype(jnp.float32), wf.astype(jnp.bfloat16),
      bf.reshape(1, H).astype(jnp.float32),
      gamma.reshape(1, H).astype(jnp.float32),
      beta.reshape(1, H).astype(jnp.float32))


def flash_attention(q, k, v, attn_bias, *, num_heads, head_dim,
                    tq_target=256, tkv_target=256):
    """q,k,v: [B, S, H] bf16 (heads packed along H); attn_bias: [B, 1, S] additive mask."""
    B, S, H = q.shape
    tq = _tile(S, tq_target)
    tkv = _tile(S, tkv_target)
    grid = (B, S // tq, S // tkv)
    scale = 1.0 / math.sqrt(head_dim)
    return pl.pallas_call(
        functools.partial(_flash_kernel, num_heads=num_heads, head_dim=head_dim, scale=scale),
        out_shape=jax.ShapeDtypeStruct((B, S, H), jnp.bfloat16),
        grid=grid,
        in_specs=[
            pl.BlockSpec((None, 1, tkv), lambda b, qi, ki: (b, 0, ki)),   # mask bias
            pl.BlockSpec((None, tq, H), lambda b, qi, ki: (b, qi, 0)),    # q (lane-dense)
            pl.BlockSpec((None, tkv, H), lambda b, qi, ki: (b, ki, 0)),   # k
            pl.BlockSpec((None, tkv, H), lambda b, qi, ki: (b, ki, 0)),   # v
        ],
        out_specs=pl.BlockSpec((None, tq, H), lambda b, qi, ki: (b, qi, 0)),  # lane-dense out
        scratch_shapes=[
            pltpu.VMEM((num_heads, tq, 1), jnp.float32),        # running max
            pltpu.VMEM((num_heads, tq, 1), jnp.float32),        # running sum
            pltpu.VMEM((num_heads, tq, head_dim), jnp.float32), # output accumulator
        ],
        compiler_params=pltpu.CompilerParams(
            dimension_semantics=("parallel", "parallel", "arbitrary"),
            vmem_limit_bytes=VMEM_LIMIT),
    )(attn_bias.astype(jnp.float32), q.astype(jnp.bfloat16),
      k.astype(jnp.bfloat16), v.astype(jnp.bfloat16))


# ------------------------------ parameter init (synthetic) -----------------------
def init_params(key):
    std = 0.02

    def nrm(k, shape):
        return std * jax.random.normal(k, shape, dtype=jnp.float32)

    keys = iter(jax.random.split(key, 16 + NUM_LAYERS * 8))
    p = {
        "word_emb": nrm(next(keys), (VOCAB, HIDDEN)),
        "pos_emb":  nrm(next(keys), (MAX_POS, HIDDEN)),
        "type_emb": nrm(next(keys), (TYPE_VOCAB, HIDDEN)),
        "emb_ln_g": jnp.ones((HIDDEN,), jnp.float32),
        "emb_ln_b": jnp.zeros((HIDDEN,), jnp.float32),
        "pool_w": nrm(next(keys), (HIDDEN, HIDDEN)),
        "pool_b": jnp.zeros((HIDDEN,), jnp.float32),
        # self.bert.cls.seq_relationship = nn.Linear(1024, n_classes) -> (HIDDEN, N_CLASSES)
        "cls_w": nrm(next(keys), (HIDDEN, N_CLASSES)),
        "cls_b": jnp.zeros((N_CLASSES,), jnp.float32),
        "layers": [],
    }
    for _ in range(NUM_LAYERS):
        wq = nrm(next(keys), (HIDDEN, HIDDEN))
        wk = nrm(next(keys), (HIDDEN, HIDDEN))
        wv = nrm(next(keys), (HIDDEN, HIDDEN))
        layer = {
            # fused QKV weight [H, 3H] (bf16 MXU inputs; f32 biases / LN params)
            "w_qkv": jnp.concatenate([wq, wk, wv], axis=1).astype(jnp.bfloat16),
            "b_qkv": jnp.zeros((3 * HIDDEN,), jnp.float32),
            "wo": nrm(next(keys), (HIDDEN, HIDDEN)).astype(jnp.bfloat16),
            "bo": jnp.zeros((HIDDEN,), jnp.float32),
            "wi": nrm(next(keys), (HIDDEN, INTER)).astype(jnp.bfloat16),
            "bi": jnp.zeros((INTER,), jnp.float32),
            "wf": nrm(next(keys), (INTER, HIDDEN)).astype(jnp.bfloat16),
            "bf": jnp.zeros((HIDDEN,), jnp.float32),
            "ln1_g": jnp.ones((HIDDEN,), jnp.float32),
            "ln1_b": jnp.zeros((HIDDEN,), jnp.float32),
            "ln2_g": jnp.ones((HIDDEN,), jnp.float32),
            "ln2_b": jnp.zeros((HIDDEN,), jnp.float32),
        }
        p["layers"].append(layer)
    return p


# ----------------------------------- forward pass --------------------------------
def bert_classifier_forward(params, input_ids, token_type_ids, input_mask):
    """Returns seq_relationship logits [B, N_CLASSES] (outputs[1] of BertForPreTraining)."""
    B, S = input_ids.shape
    H = HIDDEN
    M = B * S

    # Embedding lookups are gathers -> plain-JAX glue; everything heavy runs in kernels.
    we = params["word_emb"][input_ids]                      # [B,S,H]
    pe = params["pos_emb"][jnp.arange(S)][None, :, :]       # [1,S,H]
    te = params["type_emb"][token_type_ids]                 # [B,S,H]
    emb = (we + pe + te).reshape(M, H)
    x = layernorm(emb, params["emb_ln_g"], params["emb_ln_b"])       # bf16

    # Tiny additive mask kept as [B,1,S]; broadcast to scores inside the kernel.
    attn_bias = ((1.0 - input_mask.astype(jnp.float32)) * -10000.0).reshape(B, 1, S)

    for layer in params["layers"]:
        # Fused QKV projection (resident [H,3H] weight) -> three [M,H] bf16 outputs,
        # heads stay packed along H; no XLA head-split transposes.
        q, k, v = qkv_project(x, layer["w_qkv"], layer["b_qkv"])
        ctx = flash_attention(q.reshape(B, S, H), k.reshape(B, S, H), v.reshape(B, S, H),
                              attn_bias, num_heads=NUM_HEADS, head_dim=HEAD_DIM)  # [B,S,H]

        # Attention output projection fused with residual-add + LayerNorm (resident weight).
        x = linear_residual_ln(ctx.reshape(M, H), layer["wo"], layer["bo"],
                               residual=x, gamma=layer["ln1_g"], beta=layer["ln1_b"])
        # Fused FFN (up-proj + gelu + down-proj + residual + LayerNorm).
        x = ffn_fused(x, layer["wi"], layer["bi"], layer["wf"], layer["bf"],
                      layer["ln2_g"], layer["ln2_b"])

    # Pooler + classifier head: M=B rows, N<=HIDDEN -> pure launch overhead as a kernel;
    # do them in plain jnp (XLA fuses them for free).
    hidden = x.reshape(B, S, H)
    cls_tok = hidden[:, 0, :].astype(jnp.float32)
    pooled = jnp.tanh(cls_tok @ params["pool_w"] + params["pool_b"])
    logits = pooled @ params["cls_w"] + params["cls_b"]             # [B, N_CLASSES]
    # Note: the PyTorch forward() returns raw logits; nn.Sigmoid is defined but not applied.
    return logits


# --------------------------------------- main ------------------------------------
if __name__ == "__main__":
    key = jax.random.PRNGKey(0)
    k_ids, _ = jax.random.split(key)

    B, S = 2, 8
    input_ids = jax.random.randint(k_ids, (B, S), 0, VOCAB, dtype=jnp.int32)
    token_type_ids = jnp.zeros((B, S), dtype=jnp.int32)
    input_mask = jnp.ones((B, S), dtype=jnp.int32).at[1, 6:].set(0)   # pad tail of example 1

    params = init_params(jax.random.PRNGKey(42))

    fwd = jax.jit(bert_classifier_forward)
    logits = fwd(params, input_ids, token_type_ids, input_mask)
    logits = jax.block_until_ready(logits)

    assert logits.shape == (B, N_CLASSES), logits.shape
    assert bool(jnp.all(jnp.isfinite(logits)))
    print("KERNEL_OK")
</pallas_src>

<mosaic_0001>
module attributes {stable_mosaic.version = 11 : i64} {
  func.func @_qkv_kernel(%arg0: i32, %arg1: memref<16x32xbf16, #tpu.memory_space<vmem>>, %arg2: memref<32x96xbf16, #tpu.memory_space<vmem>>, %arg3: memref<1x96xf32, #tpu.memory_space<vmem>>, %arg4: memref<16x32xbf16, #tpu.memory_space<vmem>>, %arg5: memref<16x32xbf16, #tpu.memory_space<vmem>>, %arg6: memref<16x32xbf16, #tpu.memory_space<vmem>>) attributes {dimension_semantics = [#tpu.dimension_semantics<parallel>], iteration_bounds = array<i64: 1>, scalar_prefetch = 0 : i64, scratch_operands = 0 : i64, tpu.core_type = #tpu.core_type<tc>, window_params = [{transform_indices = @transform_0, window_bounds = array<i64: 16, 32>}, {pipeline_mode = #tpu.pipeline_mode<synchronous>, transform_indices = @transform_1, window_bounds = array<i64: 32, 96>}, {pipeline_mode = #tpu.pipeline_mode<synchronous>, transform_indices = @transform_2, window_bounds = array<i64: 1, 96>}, {transform_indices = @transform_3, window_bounds = array<i64: 16, 32>}, {transform_indices = @transform_4, window_bounds = array<i64: 16, 32>}, {transform_indices = @transform_5, window_bounds = array<i64: 16, 32>}]} {
    %c0 = arith.constant 0 : index
    %c0_0 = arith.constant 0 : index
    %0 = vector.load %arg1[%c0, %c0_0] : memref<16x32xbf16, #tpu.memory_space<vmem>>, vector<16x32xbf16>
    %c0_1 = arith.constant 0 : index
    %c0_2 = arith.constant 0 : index
    %1 = vector.load %arg2[%c0_1, %c0_2] : memref<32x96xbf16, #tpu.memory_space<vmem>>, vector<32x96xbf16>
    %cst = arith.constant dense<0.000000e+00> : vector<16x96xf32>
    %2 = tpu.matmul %0, %1, %cst {dimension_numbers = #tpu.dot_dimension_numbers<[1], [0], [0], [1], [0, 0, 1, 1], [], []>} : vector<16x32xbf16>, vector<32x96xbf16>, vector<16x96xf32> -> vector<16x96xf32>
    %c0_3 = arith.constant 0 : index
    %c0_4 = arith.constant 0 : index
    %3 = vector.load %arg3[%c0_3, %c0_4] : memref<1x96xf32, #tpu.memory_space<vmem>>, vector<1x96xf32>
    %4 = vector.broadcast %3 : vector<1x96xf32> to vector<16x96xf32>
    %5 = arith.addf %2, %4 : vector<16x96xf32>
    %6 = vector.extract_strided_slice %5 {offsets = [0, 0], sizes = [16, 32], strides = [1, 1]} : vector<16x96xf32> to vector<16x32xf32>
    %7 = arith.truncf %6 : vector<16x32xf32> to vector<16x32xbf16>
    %c0_5 = arith.constant 0 : index
    %c0_6 = arith.constant 0 : index
    %8 = vector.load %arg4[%c0_5, %c0_6] : memref<16x32xbf16, #tpu.memory_space<vmem>>, vector<16x32xbf16>
    tpu.vector_store %arg4[%c0_5, %c0_6], %7 {strides = array<i32>} : memref<16x32xbf16, #tpu.memory_space<vmem>>, vector<16x32xbf16>,
    %9 = vector.extract_strided_slice %5 {offsets = [0, 32], sizes = [16, 32], strides = [1, 1]} : vector<16x96xf32> to vector<16x32xf32>
    %10 = arith.truncf %9 : vector<16x32xf32> to vector<16x32xbf16>
    %c0_7 = arith.constant 0 : index
    %c0_8 = arith.constant 0 : index
    %11 = vector.load %arg5[%c0_7, %c0_8] : memref<16x32xbf16, #tpu.memory_space<vmem>>, vector<16x32xbf16>
    tpu.vector_store %arg5[%c0_7, %c0_8], %10 {strides = array<i32>} : memref<16x32xbf16, #tpu.memory_space<vmem>>, vector<16x32xbf16>,
    %12 = vector.extract_strided_slice %5 {offsets = [0, 64], sizes = [16, 32], strides = [1, 1]} : vector<16x96xf32> to vector<16x32xf32>
    %13 = arith.truncf %12 : vector<16x32xf32> to vector<16x32xbf16>
    %c0_9 = arith.constant 0 : index
    %c0_10 = arith.constant 0 : index
    %14 = vector.load %arg6[%c0_9, %c0_10] : memref<16x32xbf16, #tpu.memory_space<vmem>>, vector<16x32xbf16>
    tpu.vector_store %arg6[%c0_9, %c0_10], %13 {strides = array<i32>} : memref<16x32xbf16, #tpu.memory_space<vmem>>, vector<16x32xbf16>,
    return
  }
  func.func @transform_0(%arg0: i32) -> (i32, i32) {
    %c0_i32 = arith.constant 0 : i32
    %c0_i32_0 = arith.constant 0 : i32
    return %arg0, %c0_i32 : i32, i32
  }
  func.func @transform_1(%arg0: i32) -> (i32, i32) {
    %c0_i32 = arith.constant 0 : i32
    %c0_i32_0 = arith.constant 0 : i32
    %c0_i32_1 = arith.constant 0 : i32
    return %c0_i32, %c0_i32_0 : i32, i32
  }
  func.func @transform_2(%arg0: i32) -> (i32, i32) {
    %c0_i32 = arith.constant 0 : i32
    %c0_i32_0 = arith.constant 0 : i32
    %c0_i32_1 = arith.constant 0 : i32
    return %c0_i32, %c0_i32_0 : i32, i32
  }
  func.func @transform_3(%arg0: i32) -> (i32, i32) {
    %c0_i32 = arith.constant 0 : i32
    %c0_i32_0 = arith.constant 0 : i32
    return %arg0, %c0_i32 : i32, i32
  }
  func.func @transform_4(%arg0: i32) -> (i32, i32) {
    %c0_i32 = arith.constant 0 : i32
    %c0_i32_0 = arith.constant 0 : i32
    return %arg0, %c0_i32 : i32, i32
  }
  func.func @transform_5(%arg0: i32) -> (i32, i32) {
    %c0_i32 = arith.constant 0 : i32
    %c0_i32_0 = arith.constant 0 : i32
    return %arg0, %c0_i32 : i32, i32
  }
}

module attributes {stable_mosaic.version = 11 : i64} {
  func.func @_ln_kernel(%arg0: i32, %arg1: memref<16x32xbf16, #tpu.memory_space<vmem>>, %arg2: memref<1x32xf32, #tpu.memory_space<vmem>>, %arg3: memref<1x32xf32, #tpu.memory_space<vmem>>, %arg4: memref<16x32xbf16, #tpu.memory_space<vmem>>) attributes {dimension_semantics = [#tpu.dimension_semantics<parallel>], iteration_bounds = array<i64: 1>, scalar_prefetch = 0 : i64, scratch_operands = 0 : i64, tpu.core_type = #tpu.core_type<tc>, window_params = [{transform_indices = @transform_0, window_bounds = array<i64: 16, 32>}, {pipeline_mode = #tpu.pipeline_mode<synchronous>, transform_indices = @transform_1, window_bounds = array<i64: 1, 32>}, {pipeline_mode = #tpu.pipeline_mode<synchronous>, transform_indices = @transform_2, window_bounds = array<i64: 1, 32>}, {transform_indices = @transform_3, window_bounds = array<i64: 16, 32>}]} {
    %c0 = arith.constant 0 : index
    %c0_0 = arith.constant 0 : index
    %0 = vector.load %arg1[%c0, %c0_0] : memref<16x32xbf16, #tpu.memory_space<vmem>>, vector<16x32xbf16>
    %1 = arith.extf %0 : vector<16x32xbf16> to vector<16x32xf32>
    %c0_1 = arith.constant 0 : index
    %c0_2 = arith.constant 0 : index
    %2 = vector.load %arg2[%c0_1, %c0_2] : memref<1x32xf32, #tpu.memory_space<vmem>>, vector<1x32xf32>
    %c0_3 = arith.constant 0 : index
    %c0_4 = arith.constant 0 : index
    %3 = vector.load %arg3[%c0_3, %c0_4] : memref<1x32xf32, #tpu.memory_space<vmem>>, vector<1x32xf32>
    %cst = arith.constant dense<0.000000e+00> : vector<16xf32>
    %4 = vector.multi_reduction <add>, %1, %cst [1] : vector<16x32xf32> to vector<16xf32>
    %5 = vector.shape_cast %4 : vector<16xf32> to vector<16x1xf32>
    %cst_5 = arith.constant 3.200000e+01 : f32
    %6 = vector.broadcast %cst_5 : f32 to vector<16x1xf32>
    %7 = arith.divf %5, %6 : vector<16x1xf32>
    %8 = vector.broadcast %7 : vector<16x1xf32> to vector<16x32xf32>
    %9 = arith.subf %1, %8 : vector<16x32xf32>
    %10 = arith.mulf %9, %9 : vector<16x32xf32>
    %cst_6 = arith.constant dense<0.000000e+00> : vector<16xf32>
    %11 = vector.multi_reduction <add>, %10, %cst_6 [1] : vector<16x32xf32> to vector<16xf32>
    %12 = vector.shape_cast %11 : vector<16xf32> to vector<16x1xf32>
    %cst_7 = arith.constant 3.200000e+01 : f32
    %13 = vector.broadcast %cst_7 : f32 to vector<16x1xf32>
    %14 = arith.divf %12, %13 : vector<16x1xf32>
    %cst_8 = arith.constant 9.99999996E-13 : f32
    %15 = vector.broadcast %cst_8 : f32 to vector<16x1xf32>
    %16 = arith.addf %14, %15 : vector<16x1xf32>
    %17 = math.rsqrt %16 : vector<16x1xf32>
    %18 = vector.broadcast %17 : vector<16x1xf32> to vector<16x32xf32>
    %19 = arith.mulf %9, %18 : vector<16x32xf32>
    %20 = vector.broadcast %2 : vector<1x32xf32> to vector<16x32xf32>
    %21 = arith.mulf %19, %20 : vector<16x32xf32>
    %22 = vector.broadcast %3 : vector<1x32xf32> to vector<16x32xf32>
    %23 = arith.addf %21, %22 : vector<16x32xf32>
    %24 = arith.truncf %23 : vector<16x32xf32> to vector<16x32xbf16>
    %c0_9 = arith.constant 0 : index
    %c0_10 = arith.constant 0 : index
    %25 = vector.load %arg4[%c0_9, %c0_10] : memref<16x32xbf16, #tpu.memory_space<vmem>>, vector<16x32xbf16>
    tpu.vector_store %arg4[%c0_9, %c0_10], %24 {strides = array<i32>} : memref<16x32xbf16, #tpu.memory_space<vmem>>, vector<16x32xbf16>,
    return
  }
  func.func @transform_0(%arg0: i32) -> (i32, i32) {
    %c0_i32 = arith.constant 0 : i32
    %c0_i32_0 = arith.constant 0 : i32
    return %arg0, %c0_i32 : i32, i32
  }
  func.func @transform_1(%arg0: i32) -> (i32, i32) {
    %c0_i32 = arith.constant 0 : i32
    %c0_i32_0 = arith.constant 0 : i32
    %c0_i32_1 = arith.constant 0 : i32
    return %c0_i32, %c0_i32_0 : i32, i32
  }
  func.func @transform_2(%arg0: i32) -> (i32, i32) {
    %c0_i32 = arith.constant 0 : i32
    %c0_i32_0 = arith.constant 0 : i32
    %c0_i32_1 = arith.constant 0 : i32
    return %c0_i32, %c0_i32_0 : i32, i32
  }
  func.func @transform_3(%arg0: i32) -> (i32, i32) {
    %c0_i32 = arith.constant 0 : i32
    %c0_i32_0 = arith.constant 0 : i32
    return %arg0, %c0_i32 : i32, i32
  }
}

module attributes {stable_mosaic.version = 11 : i64} {
  func.func @_mm_ln_kernel(%arg0: i32, %arg1: memref<16x32xbf16, #tpu.memory_space<vmem>>, %arg2: memref<32x32xbf16, #tpu.memory_space<vmem>>, %arg3: memref<1x32xf32, #tpu.memory_space<vmem>>, %arg4: memref<16x32xbf16, #tpu.memory_space<vmem>>, %arg5: memref<1x32xf32, #tpu.memory_space<vmem>>, %arg6: memref<1x32xf32, #tpu.memory_space<vmem>>, %arg7: memref<16x32xbf16, #tpu.memory_space<vmem>>) attributes {dimension_semantics = [#tpu.dimension_semantics<parallel>], iteration_bounds = array<i64: 1>, scalar_prefetch = 0 : i64, scratch_operands = 0 : i64, tpu.core_type = #tpu.core_type<tc>, window_params = [{transform_indices = @transform_0, window_bounds = array<i64: 16, 32>}, {pipeline_mode = #tpu.pipeline_mode<synchronous>, transform_indices = @transform_1, window_bounds = array<i64: 32, 32>}, {pipeline_mode = #tpu.pipeline_mode<synchronous>, transform_indices = @transform_2, window_bounds = array<i64: 1, 32>}, {transform_indices = @transform_3, window_bounds = array<i64: 16, 32>}, {pipeline_mode = #tpu.pipeline_mode<synchronous>, transform_indices = @transform_4, window_bounds = array<i64: 1, 32>}, {pipeline_mode = #tpu.pipeline_mode<synchronous>, transform_indices = @transform_5, window_bounds = array<i64: 1, 32>}, {transform_indices = @transform_6, window_bounds = array<i64: 16, 32>}]} {
    %c0 = arith.constant 0 : index
    %c0_0 = arith.constant 0 : index
    %0 = vector.load %arg1[%c0, %c0_0] : memref<16x32xbf16, #tpu.memory_space<vmem>>, vector<16x32xbf16>
    %c0_1 = arith.constant 0 : index
    %c0_2 = arith.constant 0 : index
    %1 = vector.load %arg2[%c0_1, %c0_2] : memref<32x32xbf16, #tpu.memory_space<vmem>>, vector<32x32xbf16>
    %cst = arith.constant dense<0.000000e+00> : vector<16x32xf32>
    %2 = tpu.matmul %0, %1, %cst {dimension_numbers = #tpu.dot_dimension_numbers<[1], [0], [0], [1], [0, 0, 1, 1], [], []>} : vector<16x32xbf16>, vector<32x32xbf16>, vector<16x32xf32> -> vector<16x32xf32>
    %c0_3 = arith.constant 0 : index
    %c0_4 = arith.constant 0 : index
    %3 = vector.load %arg3[%c0_3, %c0_4] : memref<1x32xf32, #tpu.memory_space<vmem>>, vector<1x32xf32>
    %4 = vector.broadcast %3 : vector<1x32xf32> to vector<16x32xf32>
    %5 = arith.addf %2, %4 : vector<16x32xf32>
    %c0_5 = arith.constant 0 : index
    %c0_6 = arith.constant 0 : index
    %6 = vector.load %arg4[%c0_5, %c0_6] : memref<16x32xbf16, #tpu.memory_space<vmem>>, vector<16x32xbf16>
    %7 = arith.extf %6 : vector<16x32xbf16> to vector<16x32xf32>
    %8 = arith.addf %5, %7 : vector<16x32xf32>
    %c0_7 = arith.constant 0 : index
    %c0_8 = arith.constant 0 : index
    %9 = vector.load %arg5[%c0_7, %c0_8] : memref<1x32xf32, #tpu.memory_space<vmem>>, vector<1x32xf32>
    %c0_9 = arith.constant 0 : index
    %c0_10 = arith.constant 0 : index
    %10 = vector.load %arg6[%c0_9, %c0_10] : memref<1x32xf32, #tpu.memory_space<vmem>>, vector<1x32xf32>
    %cst_11 = arith.constant dense<0.000000e+00> : vector<16xf32>
    %11 = vector.multi_reduction <add>, %8, %cst_11 [1] : vector<16x32xf32> to vector<16xf32>
    %12 = vector.shape_cast %11 : vector<16xf32> to vector<16x1xf32>
    %cst_12 = arith.constant 3.200000e+01 : f32
    %13 = vector.broadcast %cst_12 : f32 to vector<16x1xf32>
    %14 = arith.divf %12, %13 : vector<16x1xf32>
    %15 = vector.broadcast %14 : vector<16x1xf32> to vector<16x32xf32>
    %16 = arith.subf %8, %15 : vector<16x32xf32>
    %17 = arith.mulf %16, %16 : vector<16x32xf32>
    %cst_13 = arith.constant dense<0.000000e+00> : vector<16xf32>
    %18 = vector.multi_reduction <add>, %17, %cst_13 [1] : vector<16x32xf32> to vector<16xf32>
    %19 = vector.shape_cast %18 : vector<16xf32> to vector<16x1xf32>
    %cst_14 = arith.constant 3.200000e+01 : f32
    %20 = vector.broadcast %cst_14 : f32 to vector<16x1xf32>
    %21 = arith.divf %19, %20 : vector<16x1xf32>
    %cst_15 = arith.constant 9.99999996E-13 : f32
    %22 = vector.broadcast %cst_15 : f32 to vector<16x1xf32>
    %23 = arith.addf %21, %22 : vector<16x1xf32>
    %24 = math.rsqrt %23 : vector<16x1xf32>
    %25 = vector.broadcast %24 : vector<16x1xf32> to vector<16x32xf32>
    %26 = arith.mulf %16, %25 : vector<16x32xf32>
    %27 = vector.broadcast %9 : vector<1x32xf32> to vector<16x32xf32>
    %28 = arith.mulf %26, %27 : vector<16x32xf32>
    %29 = vector.broadcast %10 : vector<1x32xf32> to vector<16x32xf32>
    %30 = arith.addf %28, %29 : vector<16x32xf32>
    %31 = arith.truncf %30 : vector<16x32xf32> to vector<16x32xbf16>
    %c0_16 = arith.constant 0 : index
    %c0_17 = arith.constant 0 : index
    %32 = vector.load %arg7[%c0_16, %c0_17] : memref<16x32xbf16, #tpu.memory_space<vmem>>, vector<16x32xbf16>
    tpu.vector_store %arg7[%c0_16, %c0_17], %31 {strides = array<i32>} : memref<16x32xbf16, #tpu.memory_space<vmem>>, vector<16x32xbf16>,
    return
  }
  func.func @transform_0(%arg0: i32) -> (i32, i32) {
    %c0_i32 = arith.constant 0 : i32
    %c0_i32_0 = arith.constant 0 : i32
    return %arg0, %c0_i32 : i32, i32
  }
  func.func @transform_1(%arg0: i32) -> (i32, i32) {
    %c0_i32 = arith.constant 0 : i32
    %c0_i32_0 = arith.constant 0 : i32
    %c0_i32_1 = arith.constant 0 : i32
    return %c0_i32, %c0_i32_0 : i32, i32
  }
  func.func @transform_2(%arg0: i32) -> (i32, i32) {
    %c0_i32 = arith.constant 0 : i32
    %c0_i32_0 = arith.constant 0 : i32
    %c0_i32_1 = arith.constant 0 : i32
    return %c0_i32, %c0_i32_0 : i32, i32
  }
  func.func @transform_3(%arg0: i32) -> (i32, i32) {
    %c0_i32 = arith.constant 0 : i32
    %c0_i32_0 = arith.constant 0 : i32
    return %arg0, %c0_i32 : i32, i32
  }
  func.func @transform_4(%arg0: i32) -> (i32, i32) {
    %c0_i32 = arith.constant 0 : i32
    %c0_i32_0 = arith.constant 0 : i32
    %c0_i32_1 = arith.constant 0 : i32
    return %c0_i32, %c0_i32_0 : i32, i32
  }
  func.func @transform_5(%arg0: i32) -> (i32, i32) {
    %c0_i32 = arith.constant 0 : i32
    %c0_i32_0 = arith.constant 0 : i32
    %c0_i32_1 = arith.constant 0 : i32
    return %c0_i32, %c0_i32_0 : i32, i32
  }
  func.func @transform_6(%arg0: i32) -> (i32, i32) {
    %c0_i32 = arith.constant 0 : i32
    %c0_i32_0 = arith.constant 0 : i32
    return %arg0, %c0_i32 : i32, i32
  }
}

module attributes {stable_mosaic.version = 11 : i64} {
  func.func @_flash_kernel(%arg0: i32, %arg1: i32, %arg2: i32, %arg3: memref<1x1x8xf32, #tpu.memory_space<vmem>>, %arg4: memref<1x8x32xbf16, #tpu.memory_space<vmem>>, %arg5: memref<1x8x32xbf16, #tpu.memory_space<vmem>>, %arg6: memref<1x8x32xbf16, #tpu.memory_space<vmem>>, %arg7: memref<1x8x32xbf16, #tpu.memory_space<vmem>>, %arg8: memref<4x8x1xf32, #tpu.memory_space<vmem>>, %arg9: memref<4x8x1xf32, #tpu.memory_space<vmem>>, %arg10: memref<4x8x8xf32, #tpu.memory_space<vmem>>) attributes {dimension_semantics = [#tpu.dimension_semantics<parallel>, #tpu.dimension_semantics<parallel>, #tpu.dimension_semantics<arbitrary>], iteration_bounds = array<i64: 2, 1, 1>, scalar_prefetch = 0 : i64, scratch_operands = 3 : i64, tpu.core_type = #tpu.core_type<tc>, window_params = [{transform_indices = @transform_0, window_bounds = array<i64: 1, 1, 8>}, {transform_indices = @transform_1, window_bounds = array<i64: 1, 8, 32>}, {transform_indices = @transform_2, window_bounds = array<i64: 1, 8, 32>}, {transform_indices = @transform_3, window_bounds = array<i64: 1, 8, 32>}, {transform_indices = @transform_4, window_bounds = array<i64: 1, 8, 32>}]} {
    %c0_i32 = arith.constant 0 : i32
    %0 = arith.cmpi eq, %arg2, %c0_i32 : i32
    %1 = arith.extui %0 : i1 to i32
    %c0_i32_0 = arith.constant 0 : i32
    %2 = arith.cmpi ne, %1, %c0_i32_0 : i32
    scf.if %2 {
      %cst_126 = arith.constant -1.000000e+30 : f32
      %180 = vector.broadcast %cst_126 : f32 to vector<4x8x1xf32>
      %c0_127 = arith.constant 0 : index
      %c0_128 = arith.constant 0 : index
      %c0_129 = arith.constant 0 : index
      %181 = vector.load %arg8[%c0_127, %c0_128, %c0_129] : memref<4x8x1xf32, #tpu.memory_space<vmem>>, vector<4x8x1xf32>
      tpu.vector_store %arg8[%c0_127, %c0_128, %c0_129], %180 {strides = array<i32>} : memref<4x8x1xf32, #tpu.memory_space<vmem>>, vector<4x8x1xf32>,
      %cst_130 = arith.constant 0.000000e+00 : f32
      %182 = vector.broadcast %cst_130 : f32 to vector<4x8x1xf32>
      %c0_131 = arith.constant 0 : index
      %c0_132 = arith.constant 0 : index
      %c0_133 = arith.constant 0 : index
      %183 = vector.load %arg9[%c0_131, %c0_132, %c0_133] : memref<4x8x1xf32, #tpu.memory_space<vmem>>, vector<4x8x1xf32>
      tpu.vector_store %arg9[%c0_131, %c0_132, %c0_133], %182 {strides = array<i32>} : memref<4x8x1xf32, #tpu.memory_space<vmem>>, vector<4x8x1xf32>,
      %cst_134 = arith.constant 0.000000e+00 : f32
      %184 = vector.broadcast %cst_134 : f32 to vector<4x8x8xf32>
      %c0_135 = arith.constant 0 : index
      %c0_136 = arith.constant 0 : index
      %c0_137 = arith.constant 0 : index
      %185 = vector.load %arg10[%c0_135, %c0_136, %c0_137] : memref<4x8x8xf32, #tpu.memory_space<vmem>>, vector<4x8x8xf32>
      tpu.vector_store %arg10[%c0_135, %c0_136, %c0_137], %184 {strides = array<i32>} : memref<4x8x8xf32, #tpu.memory_space<vmem>>, vector<4x8x8xf32>,
    } else {
    }
    %c0 = arith.constant 0 : index
    %c0_1 = arith.constant 0 : index
    %c0_2 = arith.constant 0 : index
    %3 = vector.load %arg3[%c0, %c0_1, %c0_2] : memref<1x1x8xf32, #tpu.memory_space<vmem>>, vector<1x1x8xf32>
    %4 = vector.shape_cast %3 : vector<1x1x8xf32> to vector<1x8xf32>
    %c0_3 = arith.constant 0 : index
    %c0_4 = arith.constant 0 : index
    %c0_5 = arith.constant 0 : index
    %5 = vector.load %arg4[%c0_3, %c0_4, %c0_5] : memref<1x8x32xbf16, #tpu.memory_space<vmem>>, vector<1x8x8xbf16>
    %6 = vector.shape_cast %5 : vector<1x8x8xbf16> to vector<8x8xbf16>
    %cst = arith.constant 3.535160e-01 : bf16
    %7 = vector.broadcast %cst : bf16 to vector<8x8xbf16>
    %8 = arith.mulf %6, %7 : vector<8x8xbf16>
    %c0_6 = arith.constant 0 : index
    %c0_7 = arith.constant 0 : index
    %c0_8 = arith.constant 0 : index
    %9 = vector.load %arg5[%c0_6, %c0_7, %c0_8] : memref<1x8x32xbf16, #tpu.memory_space<vmem>>, vector<1x8x8xbf16>
    %10 = vector.shape_cast %9 : vector<1x8x8xbf16> to vector<8x8xbf16>
    %c0_9 = arith.constant 0 : index
    %c0_10 = arith.constant 0 : index
    %c0_11 = arith.constant 0 : index
    %11 = vector.load %arg6[%c0_9, %c0_10, %c0_11] : memref<1x8x32xbf16, #tpu.memory_space<vmem>>, vector<1x8x8xbf16>
    %12 = vector.shape_cast %11 : vector<1x8x8xbf16> to vector<8x8xbf16>
    %cst_12 = arith.constant dense<0.000000e+00> : vector<8x8xf32>
    %13 = tpu.matmul %8, %10, %cst_12 {dimension_numbers = #tpu.dot_dimension_numbers<[1], [1], [0], [0], [0, 0, 1, 0], [], []>} : vector<8x8xbf16>, vector<8x8xbf16>, vector<8x8xf32> -> vector<8x8xf32>
    %14 = vector.broadcast %4 : vector<1x8xf32> to vector<8x8xf32>
    %15 = arith.addf %13, %14 : vector<8x8xf32>
    %c0_13 = arith.constant 0 : index
    %c0_14 = arith.constant 0 : index
    %c0_15 = arith.constant 0 : index
    %16 = vector.load %arg8[%c0_13, %c0_14, %c0_15] : memref<4x8x1xf32, #tpu.memory_space<vmem>>, vector<1x8x1xf32>
    %17 = vector.shape_cast %16 : vector<1x8x1xf32> to vector<8x1xf32>
    %cst_16 = arith.constant dense<0xFF800000> : vector<8xf32>
    %18 = vector.multi_reduction <maximumf>, %15, %cst_16 [1] : vector<8x8xf32> to vector<8xf32>
    %19 = vector.shape_cast %18 : vector<8xf32> to vector<8x1xf32>
    %20 = arith.maximumf %17, %19 : vector<8x1xf32>
    %21 = arith.subf %17, %20 : vector<8x1xf32>
    %22 = math.exp %21 : vector<8x1xf32>
    %23 = vector.broadcast %20 : vector<8x1xf32> to vector<8x8xf32>
    %24 = arith.subf %15, %23 : vector<8x8xf32>
    %25 = math.exp %24 : vector<8x8xf32>
    %c0_17 = arith.constant 0 : index
    %c0_18 = arith.constant 0 : index
    %c0_19 = arith.constant 0 : index
    %26 = vector.load %arg9[%c0_17, %c0_18, %c0_19] : memref<4x8x1xf32, #tpu.memory_space<vmem>>, vector<1x8x1xf32>
    %27 = vector.shape_cast %26 : vector<1x8x1xf32> to vector<8x1xf32>
    %28 = arith.mulf %22, %27 : vector<8x1xf32>
    %cst_20 = arith.constant dense<0.000000e+00> : vector<8xf32>
    %29 = vector.multi_reduction <add>, %25, %cst_20 [1] : vector<8x8xf32> to vector<8xf32>
    %30 = vector.shape_cast %29 : vector<8xf32> to vector<8x1xf32>
    %31 = arith.addf %28, %30 : vector<8x1xf32>
    %c0_21 = arith.constant 0 : index
    %c0_22 = arith.constant 0 : index
    %c0_23 = arith.constant 0 : index
    %32 = vector.load %arg9[%c0_21, %c0_22, %c0_23] : memref<4x8x1xf32, #tpu.memory_space<vmem>>, vector<1x8x1xf32>
    %33 = vector.shape_cast %32 : vector<1x8x1xf32> to vector<8x1xf32>
    %34 = vector.shape_cast %31 : vector<8x1xf32> to vector<1x8x1xf32>
    tpu.vector_store %arg9[%c0_21, %c0_22, %c0_23], %34 {strides = array<i32>} : memref<4x8x1xf32, #tpu.memory_space<vmem>>, vector<1x8x1xf32>,
    %c0_24 = arith.constant 0 : index
    %c0_25 = arith.constant 0 : index
    %c0_26 = arith.constant 0 : index
    %35 = vector.load %arg10[%c0_24, %c0_25, %c0_26] : memref<4x8x8xf32, #tpu.memory_space<vmem>>, vector<1x8x8xf32>
    %36 = vector.shape_cast %35 : vector<1x8x8xf32> to vector<8x8xf32>
    %37 = vector.broadcast %22 : vector<8x1xf32> to vector<8x8xf32>
    %38 = arith.mulf %37, %36 : vector<8x8xf32>
    %39 = arith.truncf %25 : vector<8x8xf32> to vector<8x8xbf16>
    %cst_27 = arith.constant dense<0.000000e+00> : vector<8x8xf32>
    %40 = tpu.matmul %39, %12, %cst_27 {dimension_numbers = #tpu.dot_dimension_numbers<[1], [0], [0], [1], [0, 0, 1, 1], [], []>} : vector<8x8xbf16>, vector<8x8xbf16>, vector<8x8xf32> -> vector<8x8xf32>
    %41 = arith.addf %38, %40 : vector<8x8xf32>
    %c0_28 = arith.constant 0 : index
    %c0_29 = arith.constant 0 : index
    %c0_30 = arith.constant 0 : index
    %42 = vector.load %arg10[%c0_28, %c0_29, %c0_30] : memref<4x8x8xf32, #tpu.memory_space<vmem>>, vector<1x8x8xf32>
    %43 = vector.shape_cast %42 : vector<1x8x8xf32> to vector<8x8xf32>
    %44 = vector.shape_cast %41 : vector<8x8xf32> to vector<1x8x8xf32>
    tpu.vector_store %arg10[%c0_28, %c0_29, %c0_30], %44 {strides = array<i32>} : memref<4x8x8xf32, #tpu.memory_space<vmem>>, vector<1x8x8xf32>,
    %c0_31 = arith.constant 0 : index
    %c0_32 = arith.constant 0 : index
    %c0_33 = arith.constant 0 : index
    %45 = vector.load %arg8[%c0_31, %c0_32, %c0_33] : memref<4x8x1xf32, #tpu.memory_space<vmem>>, vector<1x8x1xf32>
    %46 = vector.shape_cast %45 : vector<1x8x1xf32> to vector<8x1xf32>
    %47 = vector.shape_cast %20 : vector<8x1xf32> to vector<1x8x1xf32>
    tpu.vector_store %arg8[%c0_31, %c0_32, %c0_33], %47 {strides = array<i32>} : memref<4x8x1xf32, #tpu.memory_space<vmem>>, vector<1x8x1xf32>,
    %c0_34 = arith.constant 0 : index
    %c0_35 = arith.constant 0 : index
    %c8 = arith.constant 8 : index
    %48 = vector.load %arg4[%c0_34, %c0_35, %c8] : memref<1x8x32xbf16, #tpu.memory_space<vmem>>, vector<1x8x8xbf16>
    %49 = vector.shape_cast %48 : vector<1x8x8xbf16> to vector<8x8xbf16>
    %cst_36 = arith.constant 3.535160e-01 : bf16
    %50 = vector.broadcast %cst_36 : bf16 to vector<8x8xbf16>
    %51 = arith.mulf %49, %50 : vector<8x8xbf16>
    %c0_37 = arith.constant 0 : index
    %c0_38 = arith.constant 0 : index
    %c8_39 = arith.constant 8 : index
    %52 = vector.load %arg5[%c0_37, %c0_38, %c8_39] : memref<1x8x32xbf16, #tpu.memory_space<vmem>>, vector<1x8x8xbf16>
    %53 = vector.shape_cast %52 : vector<1x8x8xbf16> to vector<8x8xbf16>
    %c0_40 = arith.constant 0 : index
    %c0_41 = arith.constant 0 : index
    %c8_42 = arith.constant 8 : index
    %54 = vector.load %arg6[%c0_40, %c0_41, %c8_42] : memref<1x8x32xbf16, #tpu.memory_space<vmem>>, vector<1x8x8xbf16>
    %55 = vector.shape_cast %54 : vector<1x8x8xbf16> to vector<8x8xbf16>
    %cst_43 = arith.constant dense<0.000000e+00> : vector<8x8xf32>
    %56 = tpu.matmul %51, %53, %cst_43 {dimension_numbers = #tpu.dot_dimension_numbers<[1], [1], [0], [0], [0, 0, 1, 0], [], []>} : vector<8x8xbf16>, vector<8x8xbf16>, vector<8x8xf32> -> vector<8x8xf32>
    %57 = vector.broadcast %4 : vector<1x8xf32> to vector<8x8xf32>
    %58 = arith.addf %56, %57 : vector<8x8xf32>
    %c1 = arith.constant 1 : index
    %c0_44 = arith.constant 0 : index
    %c0_45 = arith.constant 0 : index
    %59 = vector.load %arg8[%c1, %c0_44, %c0_45] : memref<4x8x1xf32, #tpu.memory_space<vmem>>, vector<1x8x1xf32>
    %60 = vector.shape_cast %59 : vector<1x8x1xf32> to vector<8x1xf32>
    %cst_46 = arith.constant dense<0xFF800000> : vector<8xf32>
    %61 = vector.multi_reduction <maximumf>, %58, %cst_46 [1] : vector<8x8xf32> to vector<8xf32>
    %62 = vector.shape_cast %61 : vector<8xf32> to vector<8x1xf32>
    %63 = arith.maximumf %60, %62 : vector<8x1xf32>
    %64 = arith.subf %60, %63 : vector<8x1xf32>
    %65 = math.exp %64 : vector<8x1xf32>
    %66 = vector.broadcast %63 : vector<8x1xf32> to vector<8x8xf32>
    %67 = arith.subf %58, %66 : vector<8x8xf32>
    %68 = math.exp %67 : vector<8x8xf32>
    %c1_47 = arith.constant 1 : index
    %c0_48 = arith.constant 0 : index
    %c0_49 = arith.constant 0 : index
    %69 = vector.load %arg9[%c1_47, %c0_48, %c0_49] : memref<4x8x1xf32, #tpu.memory_space<vmem>>, vector<1x8x1xf32>
    %70 = vector.shape_cast %69 : vector<1x8x1xf32> to vector<8x1xf32>
    %71 = arith.mulf %65, %70 : vector<8x1xf32>
    %cst_50 = arith.constant dense<0.000000e+00> : vector<8xf32>
    %72 = vector.multi_reduction <add>, %68, %cst_50 [1] : vector<8x8xf32> to vector<8xf32>
    %73 = vector.shape_cast %72 : vector<8xf32> to vector<8x1xf32>
    %74 = arith.addf %71, %73 : vector<8x1xf32>
    %c1_51 = arith.constant 1 : index
    %c0_52 = arith.constant 0 : index
    %c0_53 = arith.constant 0 : index
    %75 = vector.load %arg9[%c1_51, %c0_52, %c0_53] : memref<4x8x1xf32, #tpu.memory_space<vmem>>, vector<1x8x1xf32>
    %76 = vector.shape_cast %75 : vector<1x8x1xf32> to vector<8x1xf32>
    %77 = vector.shape_cast %74 : vector<8x1xf32> to vector<1x8x1xf32>
    tpu.vector_store %arg9[%c1_51, %c0_52, %c0_53], %77 {strides = array<i32>} : memref<4x8x1xf32, #tpu.memory_space<vmem>>, vector<1x8x1xf32>,
    %c1_54 = arith.constant 1 : index
    %c0_55 = arith.constant 0 : index
    %c0_56 = arith.constant 0 : index
    %78 = vector.load %arg10[%c1_54, %c0_55, %c0_56] : memref<4x8x8xf32, #tpu.memory_space<vmem>>, vector<1x8x8xf32>
    %79 = vector.shape_cast %78 : vector<1x8x8xf32> to vector<8x8xf32>
    %80 = vector.broadcast %65 : vector<8x1xf32> to vector<8x8xf32>
    %81 = arith.mulf %80, %79 : vector<8x8xf32>
    %82 = arith.truncf %68 : vector<8x8xf32> to vector<8x8xbf16>
    %cst_57 = arith.constant dense<0.000000e+00> : vector<8x8xf32>
    %83 = tpu.matmul %82, %55, %cst_57 {dimension_numbers = #tpu.dot_dimension_numbers<[1], [0], [0], [1], [0, 0, 1, 1], [], []>} : vector<8x8xbf16>, vector<8x8xbf16>, vector<8x8xf32> -> vector<8x8xf32>
    %84 = arith.addf %81, %83 : vector<8x8xf32>
    %c1_58 = arith.constant 1 : index
    %c0_59 = arith.constant 0 : index
    %c0_60 = arith.constant 0 : index
    %85 = vector.load %arg10[%c1_58, %c0_59, %c0_60] : memref<4x8x8xf32, #tpu.memory_space<vmem>>, vector<1x8x8xf32>
    %86 = vector.shape_cast %85 : vector<1x8x8xf32> to vector<8x8xf32>
    %87 = vector.shape_cast %84 : vector<8x8xf32> to vector<1x8x8xf32>
    tpu.vector_store %arg10[%c1_58, %c0_59, %c0_60], %87 {strides = array<i32>} : memref<4x8x8xf32, #tpu.memory_space<vmem>>, vector<1x8x8xf32>,
    %c1_61 = arith.constant 1 : index
    %c0_62 = arith.constant 0 : index
    %c0_63 = arith.constant 0 : index
    %88 = vector.load %arg8[%c1_61, %c0_62, %c0_63] : memref<4x8x1xf32, #tpu.memory_space<vmem>>, vector<1x8x1xf32>
    %89 = vector.shape_cast %88 : vector<1x8x1xf32> to vector<8x1xf32>
    %90 = vector.shape_cast %63 : vector<8x1xf32> to vector<1x8x1xf32>
    tpu.vector_store %arg8[%c1_61, %c0_62, %c0_63], %90 {strides = array<i32>} : memref<4x8x1xf32, #tpu.memory_space<vmem>>, vector<1x8x1xf32>,
    %c0_64 = arith.constant 0 : index
    %c0_65 = arith.constant 0 : index
    %c16 = arith.constant 16 : index
    %91 = vector.load %arg4[%c0_64, %c0_65, %c16] : memref<1x8x32xbf16, #tpu.memory_space<vmem>>, vector<1x8x8xbf16>
    %92 = vector.shape_cast %91 : vector<1x8x8xbf16> to vector<8x8xbf16>
    %cst_66 = arith.constant 3.535160e-01 : bf16
    %93 = vector.broadcast %cst_66 : bf16 to vector<8x8xbf16>
    %94 = arith.mulf %92, %93 : vector<8x8xbf16>
    %c0_67 = arith.constant 0 : index
    %c0_68 = arith.constant 0 : index
    %c16_69 = arith.constant 16 : index
    %95 = vector.load %arg5[%c0_67, %c0_68, %c16_69] : memref<1x8x32xbf16, #tpu.memory_space<vmem>>, vector<1x8x8xbf16>
    %96 = vector.shape_cast %95 : vector<1x8x8xbf16> to vector<8x8xbf16>
    %c0_70 = arith.constant 0 : index
    %c0_71 = arith.constant 0 : index
    %c16_72 = arith.constant 16 : index
    %97 = vector.load %arg6[%c0_70, %c0_71, %c16_72] : memref<1x8x32xbf16, #tpu.memory_space<vmem>>, vector<1x8x8xbf16>
    %98 = vector.shape_cast %97 : vector<1x8x8xbf16> to vector<8x8xbf16>
    %cst_73 = arith.constant dense<0.000000e+00> : vector<8x8xf32>
    %99 = tpu.matmul %94, %96, %cst_73 {dimension_numbers = #tpu.dot_dimension_numbers<[1], [1], [0], [0], [0, 0, 1, 0], [], []>} : vector<8x8xbf16>, vector<8x8xbf16>, vector<8x8xf32> -> vector<8x8xf32>
    %100 = vector.broadcast %4 : vector<1x8xf32> to vector<8x8xf32>
    %101 = arith.addf %99, %100 : vector<8x8xf32>
    %c2 = arith.constant 2 : index
    %c0_74 = arith.constant 0 : index
    %c0_75 = arith.constant 0 : index
    %102 = vector.load %arg8[%c2, %c0_74, %c0_75] : memref<4x8x1xf32, #tpu.memory_space<vmem>>, vector<1x8x1xf32>
    %103 = vector.shape_cast %102 : vector<1x8x1xf32> to vector<8x1xf32>
    %cst_76 = arith.constant dense<0xFF800000> : vector<8xf32>
    %104 = vector.multi_reduction <maximumf>, %101, %cst_76 [1] : vector<8x8xf32> to vector<8xf32>
    %105 = vector.shape_cast %104 : vector<8xf32> to vector<8x1xf32>
    %106 = arith.maximumf %103, %105 : vector<8x1xf32>
    %107 = arith.subf %103, %106 : vector<8x1xf32>
    %108 = math.exp %107 : vector<8x1xf32>
    %109 = vector.broadcast %106 : vector<8x1xf32> to vector<8x8xf32>
    %110 = arith.subf %101, %109 : vector<8x8xf32>
    %111 = math.exp %110 : vector<8x8xf32>
    %c2_77 = arith.constant 2 : index
    %c0_78 = arith.constant 0 : index
    %c0_79 = arith.constant 0 : index
    %112 = vector.load %arg9[%c2_77, %c0_78, %c0_79] : memref<4x8x1xf32, #tpu.memory_space<vmem>>, vector<1x8x1xf32>
    %113 = vector.shape_cast %112 : vector<1x8x1xf32> to vector<8x1xf32>
    %114 = arith.mulf %108, %113 : vector<8x1xf32>
    %cst_80 = arith.constant dense<0.000000e+00> : vector<8xf32>
    %115 = vector.multi_reduction <add>, %111, %cst_80 [1] : vector<8x8xf32> to vector<8xf32>
    %116 = vector.shape_cast %115 : vector<8xf32> to vector<8x1xf32>
    %117 = arith.addf %114, %116 : vector<8x1xf32>
    %c2_81 = arith.constant 2 : index
    %c0_82 = arith.constant 0 : index
    %c0_83 = arith.constant 0 : index
    %118 = vector.load %arg9[%c2_81, %c0_82, %c0_83] : memref<4x8x1xf32, #tpu.memory_space<vmem>>, vector<1x8x1xf32>
    %119 = vector.shape_cast %118 : vector<1x8x1xf32> to vector<8x1xf32>
    %120 = vector.shape_cast %117 : vector<8x1xf32> to vector<1x8x1xf32>
    tpu.vector_store %arg9[%c2_81, %c0_82, %c0_83], %120 {strides = array<i32>} : memref<4x8x1xf32, #tpu.memory_space<vmem>>, vector<1x8x1xf32>,
    %c2_84 = arith.constant 2 : index
    %c0_85 = arith.constant 0 : index
    %c0_86 = arith.constant 0 : index
    %121 = vector.load %arg10[%c2_84, %c0_85, %c0_86] : memref<4x8x8xf32, #tpu.memory_space<vmem>>, vector<1x8x8xf32>
    %122 = vector.shape_cast %121 : vector<1x8x8xf32> to vector<8x8xf32>
    %123 = vector.broadcast %108 : vector<8x1xf32> to vector<8x8xf32>
    %124 = arith.mulf %123, %122 : vector<8x8xf32>
    %125 = arith.truncf %111 : vector<8x8xf32> to vector<8x8xbf16>
    %cst_87 = arith.constant dense<0.000000e+00> : vector<8x8xf32>
    %126 = tpu.matmul %125, %98, %cst_87 {dimension_numbers = #tpu.dot_dimension_numbers<[1], [0], [0], [1], [0, 0, 1, 1], [], []>} : vector<8x8xbf16>, vector<8x8xbf16>, vector<8x8xf32> -> vector<8x8xf32>
    %127 = arith.addf %124, %126 : vector<8x8xf32>
    %c2_88 = arith.constant 2 : index
    %c0_89 = arith.constant 0 : index
    %c0_90 = arith.constant 0 : index
    %128 = vector.load %arg10[%c2_88, %c0_89, %c0_90] : memref<4x8x8xf32, #tpu.memory_space<vmem>>, vector<1x8x8xf32>
    %129 = vector.shape_cast %128 : vector<1x8x8xf32> to vector<8x8xf32>
    %130 = vector.shape_cast %127 : vector<8x8xf32> to vector<1x8x8xf32>
    tpu.vector_store %arg10[%c2_88, %c0_89, %c0_90], %130 {strides = array<i32>} : memref<4x8x8xf32, #tpu.memory_space<vmem>>, vector<1x8x8xf32>,
    %c2_91 = arith.constant 2 : index
    %c0_92 = arith.constant 0 : index
    %c0_93 = arith.constant 0 : index
    %131 = vector.load %arg8[%c2_91, %c0_92, %c0_93] : memref<4x8x1xf32, #tpu.memory_space<vmem>>, vector<1x8x1xf32>
    %132 = vector.shape_cast %131 : vector<1x8x1xf32> to vector<8x1xf32>
    %133 = vector.shape_cast %106 : vector<8x1xf32> to vector<1x8x1xf32>
    tpu.vector_store %arg8[%c2_91, %c0_92, %c0_93], %133 {strides = array<i32>} : memref<4x8x1xf32, #tpu.memory_space<vmem>>, vector<1x8x1xf32>,
    %c0_94 = arith.constant 0 : index
    %c0_95 = arith.constant 0 : index
    %c24 = arith.constant 24 : index
    %134 = vector.load %arg4[%c0_94, %c0_95, %c24] : memref<1x8x32xbf16, #tpu.memory_space<vmem>>, vector<1x8x8xbf16>
    %135 = vector.shape_cast %134 : vector<1x8x8xbf16> to vector<8x8xbf16>
    %cst_96 = arith.constant 3.535160e-01 : bf16
    %136 = vector.broadcast %cst_96 : bf16 to vector<8x8xbf16>
    %137 = arith.mulf %135, %136 : vector<8x8xbf16>
    %c0_97 = arith.constant 0 : index
    %c0_98 = arith.constant 0 : index
    %c24_99 = arith.constant 24 : index
    %138 = vector.load %arg5[%c0_97, %c0_98, %c24_99] : memref<1x8x32xbf16, #tpu.memory_space<vmem>>, vector<1x8x8xbf16>
    %139 = vector.shape_cast %138 : vector<1x8x8xbf16> to vector<8x8xbf16>
    %c0_100 = arith.constant 0 : index
    %c0_101 = arith.constant 0 : index
    %c24_102 = arith.constant 24 : index
    %140 = vector.load %arg6[%c0_100, %c0_101, %c24_102] : memref<1x8x32xbf16, #tpu.memory_space<vmem>>, vector<1x8x8xbf16>
    %141 = vector.shape_cast %140 : vector<1x8x8xbf16> to vector<8x8xbf16>
    %cst_103 = arith.constant dense<0.000000e+00> : vector<8x8xf32>
    %142 = tpu.matmul %137, %139, %cst_103 {dimension_numbers = #tpu.dot_dimension_numbers<[1], [1], [0], [0], [0, 0, 1, 0], [], []>} : vector<8x8xbf16>, vector<8x8xbf16>, vector<8x8xf32> -> vector<8x8xf32>
    %143 = vector.broadcast %4 : vector<1x8xf32> to vector<8x8xf32>
    %144 = arith.addf %142, %143 : vector<8x8xf32>
    %c3 = arith.constant 3 : index
    %c0_104 = arith.constant 0 : index
    %c0_105 = arith.constant 0 : index
    %145 = vector.load %arg8[%c3, %c0_104, %c0_105] : memref<4x8x1xf32, #tpu.memory_space<vmem>>, vector<1x8x1xf32>
    %146 = vector.shape_cast %145 : vector<1x8x1xf32> to vector<8x1xf32>
    %cst_106 = arith.constant dense<0xFF800000> : vector<8xf32>
    %147 = vector.multi_reduction <maximumf>, %144, %cst_106 [1] : vector<8x8xf32> to vector<8xf32>
    %148 = vector.shape_cast %147 : vector<8xf32> to vector<8x1xf32>
    %149 = arith.maximumf %146, %148 : vector<8x1xf32>
    %150 = arith.subf %146, %149 : vector<8x1xf32>
    %151 = math.exp %150 : vector<8x1xf32>
    %152 = vector.broadcast %149 : vector<8x1xf32> to vector<8x8xf32>
    %153 = arith.subf %144, %152 : vector<8x8xf32>
    %154 = math.exp %153 : vector<8x8xf32>
    %c3_107 = arith.constant 3 : index
    %c0_108 = arith.constant 0 : index
    %c0_109 = arith.constant 0 : index
    %155 = vector.load %arg9[%c3_107, %c0_108, %c0_109] : memref<4x8x1xf32, #tpu.memory_space<vmem>>, vector<1x8x1xf32>
    %156 = vector.shape_cast %155 : vector<1x8x1xf32> to vector<8x1xf32>
    %157 = arith.mulf %151, %156 : vector<8x1xf32>
    %cst_110 = arith.constant dense<0.000000e+00> : vector<8xf32>
    %158 = vector.multi_reduction <add>, %154, %cst_110 [1] : vector<8x8xf32> to vector<8xf32>
    %159 = vector.shape_cast %158 : vector<8xf32> to vector<8x1xf32>
    %160 = arith.addf %157, %159 : vector<8x1xf32>
    %c3_111 = arith.constant 3 : index
    %c0_112 = arith.constant 0 : index
    %c0_113 = arith.constant 0 : index
    %161 = vector.load %arg9[%c3_111, %c0_112, %c0_113] : memref<4x8x1xf32, #tpu.memory_space<vmem>>, vector<1x8x1xf32>
    %162 = vector.shape_cast %161 : vector<1x8x1xf32> to vector<8x1xf32>
    %163 = vector.shape_cast %160 : vector<8x1xf32> to vector<1x8x1xf32>
    tpu.vector_store %arg9[%c3_111, %c0_112, %c0_113], %163 {strides = array<i32>} : memref<4x8x1xf32, #tpu.memory_space<vmem>>, vector<1x8x1xf32>,
    %c3_114 = arith.constant 3 : index
    %c0_115 = arith.constant 0 : index
    %c0_116 = arith.constant 0 : index
    %164 = vector.load %arg10[%c3_114, %c0_115, %c0_116] : memref<4x8x8xf32, #tpu.memory_space<vmem>>, vector<1x8x8xf32>
    %165 = vector.shape_cast %164 : vector<1x8x8xf32> to vector<8x8xf32>
    %166 = vector.broadcast %151 : vector<8x1xf32> to vector<8x8xf32>
    %167 = arith.mulf %166, %165 : vector<8x8xf32>
    %168 = arith.truncf %154 : vector<8x8xf32> to vector<8x8xbf16>
    %cst_117 = arith.constant dense<0.000000e+00> : vector<8x8xf32>
    %169 = tpu.matmul %168, %141, %cst_117 {dimension_numbers = #tpu.dot_dimension_numbers<[1], [0], [0], [1], [0, 0, 1, 1], [], []>} : vector<8x8xbf16>, vector<8x8xbf16>, vector<8x8xf32> -> vector<8x8xf32>
    %170 = arith.addf %167, %169 : vector<8x8xf32>
    %c3_118 = arith.constant 3 : index
    %c0_119 = arith.constant 0 : index
    %c0_120 = arith.constant 0 : index
    %171 = vector.load %arg10[%c3_118, %c0_119, %c0_120] : memref<4x8x8xf32, #tpu.memory_space<vmem>>, vector<1x8x8xf32>
    %172 = vector.shape_cast %171 : vector<1x8x8xf32> to vector<8x8xf32>
    %173 = vector.shape_cast %170 : vector<8x8xf32> to vector<1x8x8xf32>
    tpu.vector_store %arg10[%c3_118, %c0_119, %c0_120], %173 {strides = array<i32>} : memref<4x8x8xf32, #tpu.memory_space<vmem>>, vector<1x8x8xf32>,
    %c3_121 = arith.constant 3 : index
    %c0_122 = arith.constant 0 : index
    %c0_123 = arith.constant 0 : index
    %174 = vector.load %arg8[%c3_121, %c0_122, %c0_123] : memref<4x8x1xf32, #tpu.memory_space<vmem>>, vector<1x8x1xf32>
    %175 = vector.shape_cast %174 : vector<1x8x1xf32> to vector<8x1xf32>
    %176 = vector.shape_cast %149 : vector<8x1xf32> to vector<1x8x1xf32>
    tpu.vector_store %arg8[%c3_121, %c0_122, %c0_123], %176 {strides = array<i32>} : memref<4x8x1xf32, #tpu.memory_space<vmem>>, vector<1x8x1xf32>,
    %c0_i32_124 = arith.constant 0 : i32
    %177 = arith.cmpi eq, %arg2, %c0_i32_124 : i32
    %178 = arith.extui %177 : i1 to i32
    %c0_i32_125 = arith.constant 0 : i32
    %179 = arith.cmpi ne, %178, %c0_i32_125 : i32
    scf.if %179 {
      %c0_126 = arith.constant 0 : index
      %c0_127 = arith.constant 0 : index
      %c0_128 = arith.constant 0 : index
      %180 = vector.load %arg9[%c0_126, %c0_127, %c0_128] : memref<4x8x1xf32, #tpu.memory_space<vmem>>, vector<1x8x1xf32>
      %181 = vector.shape_cast %180 : vector<1x8x1xf32> to vector<8x1xf32>
      %182 = tpu.reciprocal %181 {approx = true} : vector<8x1xf32> -> vector<8x1xf32>
      %c0_129 = arith.constant 0 : index
      %c0_130 = arith.constant 0 : index
      %c0_131 = arith.constant 0 : index
      %183 = vector.load %arg10[%c0_129, %c0_130, %c0_131] : memref<4x8x8xf32, #tpu.memory_space<vmem>>, vector<1x8x8xf32>
      %184 = vector.shape_cast %183 : vector<1x8x8xf32> to vector<8x8xf32>
      %185 = vector.broadcast %182 : vector<8x1xf32> to vector<8x8xf32>
      %186 = arith.mulf %184, %185 : vector<8x8xf32>
      %187 = arith.truncf %186 : vector<8x8xf32> to vector<8x8xbf16>
      %c0_132 = arith.constant 0 : index
      %c0_133 = arith.constant 0 : index
      %c0_134 = arith.constant 0 : index
      %188 = vector.load %arg7[%c0_132, %c0_133, %c0_134] : memref<1x8x32xbf16, #tpu.memory_space<vmem>>, vector<1x8x8xbf16>
      %189 = vector.shape_cast %188 : vector<1x8x8xbf16> to vector<8x8xbf16>
      %190 = vector.shape_cast %187 : vector<8x8xbf16> to vector<1x8x8xbf16>
      tpu.vector_store %arg7[%c0_132, %c0_133, %c0_134], %190 {strides = array<i32>} : memref<1x8x32xbf16, #tpu.memory_space<vmem>>, vector<1x8x8xbf16>,
      %c1_135 = arith.constant 1 : index
      %c0_136 = arith.constant 0 : index
      %c0_137 = arith.constant 0 : index
      %191 = vector.load %arg9[%c1_135, %c0_136, %c0_137] : memref<4x8x1xf32, #tpu.memory_space<vmem>>, vector<1x8x1xf32>
      %192 = vector.shape_cast %191 : vector<1x8x1xf32> to vector<8x1xf32>
      %193 = tpu.reciprocal %192 {approx = true} : vector<8x1xf32> -> vector<8x1xf32>
      %c1_138 = arith.constant 1 : index
      %c0_139 = arith.constant 0 : index
      %c0_140 = arith.constant 0 : index
      %194 = vector.load %arg10[%c1_138, %c0_139, %c0_140] : memref<4x8x8xf32, #tpu.memory_space<vmem>>, vector<1x8x8xf32>
      %195 = vector.shape_cast %194 : vector<1x8x8xf32> to vector<8x8xf32>
      %196 = vector.broadcast %193 : vector<8x1xf32> to vector<8x8xf32>
      %197 = arith.mulf %195, %196 : vector<8x8xf32>
      %198 = arith.truncf %197 : vector<8x8xf32> to vector<8x8xbf16>
      %c0_141 = arith.constant 0 : index
      %c0_142 = arith.constant 0 : index
      %c8_143 = arith.constant 8 : index
      %199 = vector.load %arg7[%c0_141, %c0_142, %c8_143] : memref<1x8x32xbf16, #tpu.memory_space<vmem>>, vector<1x8x8xbf16>
      %200 = vector.shape_cast %199 : vector<1x8x8xbf16> to vector<8x8xbf16>
      %201 = vector.shape_cast %198 : vector<8x8xbf16> to vector<1x8x8xbf16>
      tpu.vector_store %arg7[%c0_141, %c0_142, %c8_143], %201 {strides = array<i32>} : memref<1x8x32xbf16, #tpu.memory_space<vmem>>, vector<1x8x8xbf16>,
      %c2_144 = arith.constant 2 : index
      %c0_145 = arith.constant 0 : index
      %c0_146 = arith.constant 0 : index
      %202 = vector.load %arg9[%c2_144, %c0_145, %c0_146] : memref<4x8x1xf32, #tpu.memory_space<vmem>>, vector<1x8x1xf32>
      %203 = vector.shape_cast %202 : vector<1x8x1xf32> to vector<8x1xf32>
      %204 = tpu.reciprocal %203 {approx = true} : vector<8x1xf32> -> vector<8x1xf32>
      %c2_147 = arith.constant 2 : index
      %c0_148 = arith.constant 0 : index
      %c0_149 = arith.constant 0 : index
      %205 = vector.load %arg10[%c2_147, %c0_148, %c0_149] : memref<4x8x8xf32, #tpu.memory_space<vmem>>, vector<1x8x8xf32>
      %206 = vector.shape_cast %205 : vector<1x8x8xf32> to vector<8x8xf32>
      %207 = vector.broadcast %204 : vector<8x1xf32> to vector<8x8xf32>
      %208 = arith.mulf %206, %207 : vector<8x8xf32>
      %209 = arith.truncf %208 : vector<8x8xf32> to vector<8x8xbf16>
      %c0_150 = arith.constant 0 : index
      %c0_151 = arith.constant 0 : index
      %c16_152 = arith.constant 16 : index
      %210 = vector.load %arg7[%c0_150, %c0_151, %c16_152] : memref<1x8x32xbf16, #tpu.memory_space<vmem>>, vector<1x8x8xbf16>
      %211 = vector.shape_cast %210 : vector<1x8x8xbf16> to vector<8x8xbf16>
      %212 = vector.shape_cast %209 : vector<8x8xbf16> to vector<1x8x8xbf16>
      tpu.vector_store %arg7[%c0_150, %c0_151, %c16_152], %212 {strides = array<i32>} : memref<1x8x32xbf16, #tpu.memory_space<vmem>>, vector<1x8x8xbf16>,
      %c3_153 = arith.constant 3 : index
      %c0_154 = arith.constant 0 : index
      %c0_155 = arith.constant 0 : index
      %213 = vector.load %arg9[%c3_153, %c0_154, %c0_155] : memref<4x8x1xf32, #tpu.memory_space<vmem>>, vector<1x8x1xf32>
      %214 = vector.shape_cast %213 : vector<1x8x1xf32> to vector<8x1xf32>
      %215 = tpu.reciprocal %214 {approx = true} : vector<8x1xf32> -> vector<8x1xf32>
      %c3_156 = arith.constant 3 : index
      %c0_157 = arith.constant 0 : index
      %c0_158 = arith.constant 0 : index
      %216 = vector.load %arg10[%c3_156, %c0_157, %c0_158] : memref<4x8x8xf32, #tpu.memory_space<vmem>>, vector<1x8x8xf32>
      %217 = vector.shape_cast %216 : vector<1x8x8xf32> to vector<8x8xf32>
      %218 = vector.broadcast %215 : vector<8x1xf32> to vector<8x8xf32>
      %219 = arith.mulf %217, %218 : vector<8x8xf32>
      %220 = arith.truncf %219 : vector<8x8xf32> to vector<8x8xbf16>
      %c0_159 = arith.constant 0 : index
      %c0_160 = arith.constant 0 : index
      %c24_161 = arith.constant 24 : index
      %221 = vector.load %arg7[%c0_159, %c0_160, %c24_161] : memref<1x8x32xbf16, #tpu.memory_space<vmem>>, vector<1x8x8xbf16>
      %222 = vector.shape_cast %221 : vector<1x8x8xbf16> to vector<8x8xbf16>
      %223 = vector.shape_cast %220 : vector<8x8xbf16> to vector<1x8x8xbf16>
      tpu.vector_store %arg7[%c0_159, %c0_160, %c24_161], %223 {strides = array<i32>} : memref<1x8x32xbf16, #tpu.memory_space<vmem>>, vector<1x8x8xbf16>,
    } else {
    }
    return
  }
  func.func @transform_0(%arg0: i32, %arg1: i32, %arg2: i32) -> (i32, i32, i32) {
    %c0_i32 = arith.constant 0 : i32
    %c0_i32_0 = arith.constant 0 : i32
    return %arg0, %c0_i32, %arg2 : i32, i32, i32
  }
  func.func @transform_1(%arg0: i32, %arg1: i32, %arg2: i32) -> (i32, i32, i32) {
    %c0_i32 = arith.constant 0 : i32
    %c0_i32_0 = arith.constant 0 : i32
    return %arg0, %arg1, %c0_i32 : i32, i32, i32
  }
  func.func @transform_2(%arg0: i32, %arg1: i32, %arg2: i32) -> (i32, i32, i32) {
    %c0_i32 = arith.constant 0 : i32
    %c0_i32_0 = arith.constant 0 : i32
    return %arg0, %arg2, %c0_i32 : i32, i32, i32
  }
  func.func @transform_3(%arg0: i32, %arg1: i32, %arg2: i32) -> (i32, i32, i32) {
    %c0_i32 = arith.constant 0 : i32
    %c0_i32_0 = arith.constant 0 : i32
    return %arg0, %arg2, %c0_i32 : i32, i32, i32
  }
  func.func @transform_4(%arg0: i32, %arg1: i32, %arg2: i32) -> (i32, i32, i32) {
    %c0_i32 = arith.constant 0 : i32
    %c0_i32_0 = arith.constant 0 : i32
    return %arg0, %arg1, %c0_i32 : i32, i32, i32
  }
}

module attributes {stable_mosaic.version = 11 : i64} {
  func.func @_ffn_kernel(%arg0: i32, %arg1: i32, %arg2: memref<16x32xbf16, #tpu.memory_space<vmem>>, %arg3: memref<32x64xbf16, #tpu.memory_space<vmem>>, %arg4: memref<1x64xf32, #tpu.memory_space<vmem>>, %arg5: memref<64x32xbf16, #tpu.memory_space<vmem>>, %arg6: memref<1x32xf32, #tpu.memory_space<vmem>>, %arg7: memref<1x32xf32, #tpu.memory_space<vmem>>, %arg8: memref<1x32xf32, #tpu.memory_space<vmem>>, %arg9: memref<16x32xbf16, #tpu.memory_space<vmem>>, %arg10: memref<16x32xf32, #tpu.memory_space<vmem>>) attributes {dimension_semantics = [#tpu.dimension_semantics<parallel>, #tpu.dimension_semantics<arbitrary>], iteration_bounds = array<i64: 1, 1>, scalar_prefetch = 0 : i64, scratch_operands = 1 : i64, tpu.core_type = #tpu.core_type<tc>, window_params = [{transform_indices = @transform_0, window_bounds = array<i64: 16, 32>}, {transform_indices = @transform_1, window_bounds = array<i64: 32, 64>}, {transform_indices = @transform_2, window_bounds = array<i64: 1, 64>}, {transform_indices = @transform_3, window_bounds = array<i64: 64, 32>}, {pipeline_mode = #tpu.pipeline_mode<synchronous>, transform_indices = @transform_4, window_bounds = array<i64: 1, 32>}, {pipeline_mode = #tpu.pipeline_mode<synchronous>, transform_indices = @transform_5, window_bounds = array<i64: 1, 32>}, {pipeline_mode = #tpu.pipeline_mode<synchronous>, transform_indices = @transform_6, window_bounds = array<i64: 1, 32>}, {transform_indices = @transform_7, window_bounds = array<i64: 16, 32>}]} {
    %c0_i32 = arith.constant 0 : i32
    %0 = arith.cmpi eq, %arg1, %c0_i32 : i32
    %1 = arith.extui %0 : i1 to i32
    %c0_i32_0 = arith.constant 0 : i32
    %2 = arith.cmpi ne, %1, %c0_i32_0 : i32
    scf.if %2 {
      %cst_19 = arith.constant 0.000000e+00 : f32
      %31 = vector.broadcast %cst_19 : f32 to vector<16x32xf32>
      %c0_20 = arith.constant 0 : index
      %c0_21 = arith.constant 0 : index
      %32 = vector.load %arg10[%c0_20, %c0_21] : memref<16x32xf32, #tpu.memory_space<vmem>>, vector<16x32xf32>
      tpu.vector_store %arg10[%c0_20, %c0_21], %31 {strides = array<i32>} : memref<16x32xf32, #tpu.memory_space<vmem>>, vector<16x32xf32>,
    } else {
    }
    %c0 = arith.constant 0 : index
    %c0_1 = arith.constant 0 : index
    %3 = vector.load %arg2[%c0, %c0_1] : memref<16x32xbf16, #tpu.memory_space<vmem>>, vector<16x32xbf16>
    %c0_2 = arith.constant 0 : index
    %c0_3 = arith.constant 0 : index
    %4 = vector.load %arg3[%c0_2, %c0_3] : memref<32x64xbf16, #tpu.memory_space<vmem>>, vector<32x64xbf16>
    %cst = arith.constant dense<0.000000e+00> : vector<16x64xf32>
    %5 = tpu.matmul %3, %4, %cst {dimension_numbers = #tpu.dot_dimension_numbers<[1], [0], [0], [1], [0, 0, 1, 1], [], []>} : vector<16x32xbf16>, vector<32x64xbf16>, vector<16x64xf32> -> vector<16x64xf32>
    %c0_4 = arith.constant 0 : index
    %c0_5 = arith.constant 0 : index
    %6 = vector.load %arg4[%c0_4, %c0_5] : memref<1x64xf32, #tpu.memory_space<vmem>>, vector<1x64xf32>
    %7 = vector.broadcast %6 : vector<1x64xf32> to vector<16x64xf32>
    %8 = arith.addf %5, %7 : vector<16x64xf32>
    %cst_6 = arith.constant 5.000000e-01 : f32
    %9 = vector.broadcast %cst_6 : f32 to vector<16x64xf32>
    %10 = arith.mulf %9, %8 : vector<16x64xf32>
    %cst_7 = arith.constant 4.471500e-02 : f32
    %11 = vector.broadcast %cst_7 : f32 to vector<16x64xf32>
    %12 = arith.mulf %11, %8 : vector<16x64xf32>
    %13 = arith.mulf %12, %8 : vector<16x64xf32>
    %14 = arith.mulf %13, %8 : vector<16x64xf32>
    %15 = arith.addf %8, %14 : vector<16x64xf32>
    %cst_8 = arith.constant 0.797884583 : f32
    %16 = vector.broadcast %cst_8 : f32 to vector<16x64xf32>
    %17 = arith.mulf %16, %15 : vector<16x64xf32>
    %18 = math.tanh %17 : vector<16x64xf32>
    %cst_9 = arith.constant 1.000000e+00 : f32
    %19 = vector.broadcast %cst_9 : f32 to vector<16x64xf32>
    %20 = arith.addf %19, %18 : vector<16x64xf32>
    %21 = arith.mulf %10, %20 : vector<16x64xf32>
    %c0_10 = arith.constant 0 : index
    %c0_11 = arith.constant 0 : index
    %22 = vector.load %arg10[%c0_10, %c0_11] : memref<16x32xf32, #tpu.memory_space<vmem>>, vector<16x32xf32>
    %23 = arith.truncf %21 : vector<16x64xf32> to vector<16x64xbf16>
    %c0_12 = arith.constant 0 : index
    %c0_13 = arith.constant 0 : index
    %24 = vector.load %arg5[%c0_12, %c0_13] : memref<64x32xbf16, #tpu.memory_space<vmem>>, vector<64x32xbf16>
    %cst_14 = arith.constant dense<0.000000e+00> : vector<16x32xf32>
    %25 = tpu.matmul %23, %24, %cst_14 {dimension_numbers = #tpu.dot_dimension_numbers<[1], [0], [0], [1], [0, 0, 1, 1], [], []>} : vector<16x64xbf16>, vector<64x32xbf16>, vector<16x32xf32> -> vector<16x32xf32>
    %26 = arith.addf %22, %25 : vector<16x32xf32>
    %c0_15 = arith.constant 0 : index
    %c0_16 = arith.constant 0 : index
    %27 = vector.load %arg10[%c0_15, %c0_16] : memref<16x32xf32, #tpu.memory_space<vmem>>, vector<16x32xf32>
    tpu.vector_store %arg10[%c0_15, %c0_16], %26 {strides = array<i32>} : memref<16x32xf32, #tpu.memory_space<vmem>>, vector<16x32xf32>,
    %c0_i32_17 = arith.constant 0 : i32
    %28 = arith.cmpi eq, %arg1, %c0_i32_17 : i32
    %29 = arith.extui %28 : i1 to i32
    %c0_i32_18 = arith.constant 0 : i32
    %30 = arith.cmpi ne, %29, %c0_i32_18 : i32
    scf.if %30 {
      %c0_19 = arith.constant 0 : index
      %c0_20 = arith.constant 0 : index
      %31 = vector.load %arg10[%c0_19, %c0_20] : memref<16x32xf32, #tpu.memory_space<vmem>>, vector<16x32xf32>
      %c0_21 = arith.constant 0 : index
      %c0_22 = arith.constant 0 : index
      %32 = vector.load %arg6[%c0_21, %c0_22] : memref<1x32xf32, #tpu.memory_space<vmem>>, vector<1x32xf32>
      %33 = vector.broadcast %32 : vector<1x32xf32> to vector<16x32xf32>
      %34 = arith.addf %31, %33 : vector<16x32xf32>
      %c0_23 = arith.constant 0 : index
      %c0_24 = arith.constant 0 : index
      %35 = vector.load %arg2[%c0_23, %c0_24] : memref<16x32xbf16, #tpu.memory_space<vmem>>, vector<16x32xbf16>
      %36 = arith.extf %35 : vector<16x32xbf16> to vector<16x32xf32>
      %37 = arith.addf %34, %36 : vector<16x32xf32>
      %c0_25 = arith.constant 0 : index
      %c0_26 = arith.constant 0 : index
      %38 = vector.load %arg7[%c0_25, %c0_26] : memref<1x32xf32, #tpu.memory_space<vmem>>, vector<1x32xf32>
      %c0_27 = arith.constant 0 : index
      %c0_28 = arith.constant 0 : index
      %39 = vector.load %arg8[%c0_27, %c0_28] : memref<1x32xf32, #tpu.memory_space<vmem>>, vector<1x32xf32>
      %cst_29 = arith.constant dense<0.000000e+00> : vector<16xf32>
      %40 = vector.multi_reduction <add>, %37, %cst_29 [1] : vector<16x32xf32> to vector<16xf32>
      %41 = vector.shape_cast %40 : vector<16xf32> to vector<16x1xf32>
      %cst_30 = arith.constant 3.200000e+01 : f32
      %42 = vector.broadcast %cst_30 : f32 to vector<16x1xf32>
      %43 = arith.divf %41, %42 : vector<16x1xf32>
      %44 = vector.broadcast %43 : vector<16x1xf32> to vector<16x32xf32>
      %45 = arith.subf %37, %44 : vector<16x32xf32>
      %46 = arith.mulf %45, %45 : vector<16x32xf32>
      %cst_31 = arith.constant dense<0.000000e+00> : vector<16xf32>
      %47 = vector.multi_reduction <add>, %46, %cst_31 [1] : vector<16x32xf32> to vector<16xf32>
      %48 = vector.shape_cast %47 : vector<16xf32> to vector<16x1xf32>
      %cst_32 = arith.constant 3.200000e+01 : f32
      %49 = vector.broadcast %cst_32 : f32 to vector<16x1xf32>
      %50 = arith.divf %48, %49 : vector<16x1xf32>
      %cst_33 = arith.constant 9.99999996E-13 : f32
      %51 = vector.broadcast %cst_33 : f32 to vector<16x1xf32>
      %52 = arith.addf %50, %51 : vector<16x1xf32>
      %53 = math.rsqrt %52 : vector<16x1xf32>
      %54 = vector.broadcast %53 : vector<16x1xf32> to vector<16x32xf32>
      %55 = arith.mulf %45, %54 : vector<16x32xf32>
      %56 = vector.broadcast %38 : vector<1x32xf32> to vector<16x32xf32>
      %57 = arith.mulf %55, %56 : vector<16x32xf32>
      %58 = vector.broadcast %39 : vector<1x32xf32> to vector<16x32xf32>
      %59 = arith.addf %57, %58 : vector<16x32xf32>
      %60 = arith.truncf %59 : vector<16x32xf32> to vector<16x32xbf16>
      %c0_34 = arith.constant 0 : index
      %c0_35 = arith.constant 0 : index
      %61 = vector.load %arg9[%c0_34, %c0_35] : memref<16x32xbf16, #tpu.memory_space<vmem>>, vector<16x32xbf16>
      tpu.vector_store %arg9[%c0_34, %c0_35], %60 {strides = array<i32>} : memref<16x32xbf16, #tpu.memory_space<vmem>>, vector<16x32xbf16>,
    } else {
    }
    return
  }
  func.func @transform_0(%arg0: i32, %arg1: i32) -> (i32, i32) {
    %c0_i32 = arith.constant 0 : i32
    %c0_i32_0 = arith.constant 0 : i32
    return %arg0, %c0_i32 : i32, i32
  }
  func.func @transform_1(%arg0: i32, %arg1: i32) -> (i32, i32) {
    %c0_i32 = arith.constant 0 : i32
    %c0_i32_0 = arith.constant 0 : i32
    return %c0_i32, %arg1 : i32, i32
  }
  func.func @transform_2(%arg0: i32, %arg1: i32) -> (i32, i32) {
    %c0_i32 = arith.constant 0 : i32
    %c0_i32_0 = arith.constant 0 : i32
    return %c0_i32, %arg1 : i32, i32
  }
  func.func @transform_3(%arg0: i32, %arg1: i32) -> (i32, i32) {
    %c0_i32 = arith.constant 0 : i32
    %c0_i32_0 = arith.constant 0 : i32
    return %arg1, %c0_i32 : i32, i32
  }
  func.func @transform_4(%arg0: i32, %arg1: i32) -> (i32, i32) {
    %c0_i32 = arith.constant 0 : i32
    %c0_i32_0 = arith.constant 0 : i32
    %c0_i32_1 = arith.constant 0 : i32
    return %c0_i32, %c0_i32_0 : i32, i32
  }
  func.func @transform_5(%arg0: i32, %arg1: i32) -> (i32, i32) {
    %c0_i32 = arith.constant 0 : i32
    %c0_i32_0 = arith.constant 0 : i32
    %c0_i32_1 = arith.constant 0 : i32
    return %c0_i32, %c0_i32_0 : i32, i32
  }
  func.func @transform_6(%arg0: i32, %arg1: i32) -> (i32, i32) {
    %c0_i32 = arith.constant 0 : i32
    %c0_i32_0 = arith.constant 0 : i32
    %c0_i32_1 = arith.constant 0 : i32
    return %c0_i32, %c0_i32_0 : i32, i32
  }
  func.func @transform_7(%arg0: i32, %arg1: i32) -> (i32, i32) {
    %c0_i32 = arith.constant 0 : i32
    %c0_i32_0 = arith.constant 0 : i32
    return %arg0, %c0_i32 : i32, i32
  }
}

</mosaic_0001>

<llo_original>
// kernel: bert_classifier_forward.12
$region0: #{bert_classifier_forward.12}
  #allocation0 [shape = 'u32[]', space=smem, size = 0x4, offset = 0x4, fixed_abs, tag = 'smem constant byte address 0x4 - core index']
  #allocation1 [shape = 'u32[72,128]{1,0:T(1,128)}', space=vmem, size = 0x9000, scoped, tag = 'internal scratch']
  %s0 = inlined_call_operand.vmem [shape: bf16[16,32], index: 0, kind: input, shape index: {}]
  %s1 = inlined_call_operand.vmem [shape: bf16[32,32], index: 1, kind: input, shape index: {}]
  %s2 = inlined_call_operand.vmem [shape: f32[1,32], index: 2, kind: input, shape index: {}]
  %s3 = inlined_call_operand.vmem [shape: bf16[16,32], index: 3, kind: input, shape index: {}]
  %s4 = inlined_call_operand.vmem [shape: f32[1,32], index: 4, kind: input, shape index: {}]
  %s5 = inlined_call_operand.vmem [shape: f32[1,32], index: 5, kind: input, shape index: {}]
  %s6 = inlined_call_operand.vmem [shape: bf16[16,32], index: 6, kind: output, shape index: {}]
  %s7 = sld [smem:[#allocation0]]
  $region34: #{bert_classifier_forward.12} parent=0
    _
  %s9 = ssub.s32 1, %s7
  %s10 = scalar_select 0, %s9, %s7
  // Predicated region
  $region2: #{bert_classifier_forward.12} parent=0 // pred_check
    _
  $region3: #{bert_classifier_forward.12} parent=0 // pred_check_branch
    %12 = sbr.rel (0) target = $region5
  $region4: #{bert_classifier_forward.12} parent=0 // pred_region
    _
  $region5: #{bert_classifier_forward.12} parent=0 // pred_fallthru
    _
  // Predicated region
  $region6: #{bert_classifier_forward.12} parent=0 // pred_check
    _
  $region7: #{bert_classifier_forward.12} parent=0 // pred_check_branch
    %14 = sbr.rel (0) target = $region9
  $region8: #{bert_classifier_forward.12} parent=0 // pred_region
    _
  $region9: #{bert_classifier_forward.12} parent=0 // pred_fallthru
    _
  // Predicated region
  $region10: #{bert_classifier_forward.12} parent=0 // pred_check
    _
  $region11: #{bert_classifier_forward.12} parent=0 // pred_check_branch
    %16 = sbr.rel (0) target = $region13
  $region12: #{bert_classifier_forward.12} parent=0 // pred_region
    _
  $region13: #{bert_classifier_forward.12} parent=0 // pred_fallthru
    _
  // Predicated region
  $region14: #{bert_classifier_forward.12} parent=0 // pred_check
    _
  $region15: #{bert_classifier_forward.12} parent=0 // pred_check_branch
    %18 = sbr.rel (0) target = $region17
  $region16: #{bert_classifier_forward.12} parent=0 // pred_region
    _
  $region17: #{bert_classifier_forward.12} parent=0 // pred_fallthru
    _
  // Predicated region
  $region18: #{bert_classifier_forward.12} parent=0 // pred_check
    _
  $region19: #{bert_classifier_forward.12} parent=0 // pred_check_branch
    %20 = sbr.rel (0) target = $region21
  $region20: #{bert_classifier_forward.12} parent=0 // pred_region
    _
  $region21: #{bert_classifier_forward.12} parent=0 // pred_fallthru
    _
  // Predicated region
  $region22: #{bert_classifier_forward.12} parent=0 // pred_check
    _
  $region23: #{bert_classifier_forward.12} parent=0 // pred_check_branch
    %22 = sbr.rel (0) target = $region25
  $region24: #{bert_classifier_forward.12} parent=0 // pred_region
    _
  $region25: #{bert_classifier_forward.12} parent=0 // pred_fallthru
    _
  %v24 = vld [vmem:[%s0] sm:$0xf]
  %v25 = vld [vmem:[%s0 + $0x4] sm:$0xf]
  %v26 = vld [vmem:[%s1] sm:$0xf]
  %v27 = vld [vmem:[%s1 + $0x4] sm:$0xf]
  %v28 = vld [vmem:[%s1 + $0x8] sm:$0xf]
  %v29 = vld [vmem:[%s1 + $0xc] sm:$0xf]
  %v30 = vld [vmem:[%s2] sm:$0x1]
  %v32 = vperm.slane %v30, 0
  %v36 = vunpack.c.l.b16 %v24
  %v37 = vunpack.c.l.b16 %v25
  %v38 = vpack.c.b16 %v37, %v36
  %v43 = vunpack.c.l.b16 %v26
  %v44 = vunpack.c.l.b16 %v27
  %v45 = vunpack.c.l.b16 %v28
  %v46 = vunpack.c.l.b16 %v29
  %v47 = vpack.c.b16 %v44, %v43
  %v48 = vpack.c.b16 %v46, %v45
  %vm51 = vcmask 261120
  %v53 = vsel %vm51, %v38, 0
  %55 = vmatpush.bf16.msra.mxu0 0
  %56 = vmatpush.bf16.msra.mxu0 0
  %57 = vmatpush.bf16.msra.mxu0 0
  %58 = vmatpush.bf16.msra.mxu0 0
  %59 = vmatpush.bf16.msra.mxu0 0
  %60 = vmatpush.bf16.msra.mxu0 0
  %61 = vmatpush.bf16.msra.mxu0 %v48
  %62 = vmatpush.bf16.msra.mxu0 %v47
  %63 = vmatmul.bf16.gmra.mxu0 %v53
  %v64 = vpop.f32.mrf.mxu0
  %v65 = vadd.f32 %v32, %v64
  %v66 = vpop.f32.mrf.mxu0
  %v67 = vadd.f32 %v32, %v66
  %68 = vdwg.mxu0
  %v69 = vld [vmem:[%s3] sm:$0xf]
  %v70 = vld [vmem:[%s3 + $0x4] sm:$0xf]
  %v71 = vunpack.c.l.bf16 %v69
  %v72 = vunpack.c.l.bf16 %v70
  %v73 = vadd.f32 %v65, %v71
  %v74 = vadd.f32 %v67, %v72
  %v75 = vld [vmem:[%s4] sm:$0x1]
  %v76 = vld [vmem:[%s5] sm:$0x1]
  %v77 = vsel %vm51, %v73, 0.0
  %78 = vadd.xlane.f32.xlu0 %v77
  %v79 = vpop.xlane.xlu0 %78
  %v80 = vsel %vm51, %v74, 0.0
  %81 = vadd.xlane.f32.xlu0 %v80
  %v82 = vpop.xlane.xlu0 %81
  %v83 = vrcp.pop 32.0
  %v84 = vmul.f32 32.0, %v83
  %v85 = vsub.f32 1.0, %v84
  %v86 = vmul.f32 %v83, %v85
  %v87 = vadd.f32 %v83, %v86
  %vm88 = vweird.f32 %v83
  %v89 = vsel %vm88, %v83, %v87
  %v90 = vmul.f32 %v79, %v89
  %v91 = vmul.f32 %v82, %v89
  %v92 = vsub.f32 %v73, %v90
  %v93 = vsub.f32 %v74, %v91
  %v94 = vmul.f32 %v92, %v92
  %v95 = vmul.f32 %v93, %v93
  %v96 = vsel %vm51, %v94, 0.0
  %97 = vadd.xlane.f32.xlu0 %v96
  %v98 = vpop.xlane.xlu0 %97
  %v99 = vsel %vm51, %v95, 0.0
  %100 = vadd.xlane.f32.xlu0 %v99
  %v101 = vpop.xlane.xlu0 %100
  %v102 = vmul.f32 %v98, %v89
  %v103 = vmul.f32 %v101, %v89
  %v104 = vadd.f32 %v102, 1e-12
  %v105 = vadd.f32 %v103, 1e-12
  %v106 = vrsqrt.pop %v104
  %v107 = vmul.f32 %v106, %v104
  %v108 = vmul.f32 %v107, %v106
  %v109 = vmul.f32 0.5, %v108
  %v110 = vsub.f32 1.5, %v109
  %v111 = vmul.f32 %v106, %v110
  %vm112 = vweird.f32 %v104
  %vm113 = vweird.f32 %v106
  %vm114 = vmor %vm112, %vm113
  %v115 = vsel %vm114, %v106, %v111
  %v116 = vrsqrt.pop %v105
  %v117 = vmul.f32 %v116, %v105
  %v118 = vmul.f32 %v117, %v116
  %v119 = vmul.f32 0.5, %v118
  %v120 = vsub.f32 1.5, %v119
  %v121 = vmul.f32 %v116, %v120
  %vm122 = vweird.f32 %v105
  %vm123 = vweird.f32 %v116
  %vm124 = vmor %vm122, %vm123
  %v125 = vsel %vm124, %v116, %v121
  %v126 = vmul.f32 %v92, %v115
  %v127 = vmul.f32 %v93, %v125
  %v129 = vperm.slane %v75, 0
  %v131 = vmul.f32 %v126, %v129
  %v132 = vmul.f32 %v127, %v129
  %v134 = vperm.slane %v76, 0
  %v136 = vadd.f32 %v131, %v134
  %v137 = vadd.f32 %v132, %v134
  %v138 = vpack.c.bf16 %v136, %v136
  %v139 = vpack.c.bf16 %v137, %v137
  %vm140 = vcmask 257024
  %141 = vst.msk [vmem:[%s6] sm:$0xf] %vm140, %v138
  %142 = vst.msk [vmem:[%s6 + $0x4] sm:$0xf] %vm140, %v139
  // Predicated region
  $region26: #{bert_classifier_forward.12} parent=0 // pred_check
    _
  $region27: #{bert_classifier_forward.12} parent=0 // pred_check_branch
    %144 = sbr.rel (0) target = $region29
  $region28: #{bert_classifier_forward.12} parent=0 // pred_region
    _
  $region29: #{bert_classifier_forward.12} parent=0 // pred_fallthru
    _
  // Predicated region
  $region30: #{bert_classifier_forward.12} parent=0 // pred_check
    _
  $region31: #{bert_classifier_forward.12} parent=0 // pred_check_branch
    %146 = sbr.rel (0) target = $region33
  $region32: #{bert_classifier_forward.12} parent=0 // pred_region
    _
  $region33: #{bert_classifier_forward.12} parent=0 // pred_fallthru
    _

// kernel: bert_classifier_forward.10
$region0: #{bert_classifier_forward.10}
  #allocation0 [shape = 'u32[]', space=smem, size = 0x4, offset = 0x4, fixed_abs, tag = 'smem constant byte address 0x4 - core index']
  #allocation1 [shape = 'u32[72,128]{1,0:T(1,128)}', space=vmem, size = 0x9000, scoped, tag = 'internal scratch']
  %s0 = inlined_call_operand.vmem [shape: bf16[16,32], index: 0, kind: input, shape index: {}]
  %s1 = inlined_call_operand.vmem [shape: bf16[32,96], index: 1, kind: input, shape index: {}]
  %s2 = inlined_call_operand.vmem [shape: f32[1,96], index: 2, kind: input, shape index: {}]
  %s3 = inlined_call_operand.vmem [shape: bf16[16,32], index: 3, kind: output, shape index: {0}]
  %s4 = inlined_call_operand.vmem [shape: bf16[16,32], index: 4, kind: output, shape index: {1}]
  %s5 = inlined_call_operand.vmem [shape: bf16[16,32], index: 5, kind: output, shape index: {2}]
  %6 = xla_tuple %s3, %s4, %s5
  %s7 = sld [smem:[#allocation0]]
  $region38: #{bert_classifier_forward.10} parent=0
    _
  %s9 = ssub.s32 1, %s7
  %s10 = scalar_select 0, %s9, %s7
  // Predicated region
  $region2: #{bert_classifier_forward.10} parent=0 // pred_check
    _
  $region3: #{bert_classifier_forward.10} parent=0 // pred_check_branch
    %12 = sbr.rel (0) target = $region5
  $region4: #{bert_classifier_forward.10} parent=0 // pred_region
    _
  $region5: #{bert_classifier_forward.10} parent=0 // pred_fallthru
    _
  // Predicated region
  $region6: #{bert_classifier_forward.10} parent=0 // pred_check
    _
  $region7: #{bert_classifier_forward.10} parent=0 // pred_check_branch
    %14 = sbr.rel (0) target = $region9
  $region8: #{bert_classifier_forward.10} parent=0 // pred_region
    _
  $region9: #{bert_classifier_forward.10} parent=0 // pred_fallthru
    _
  // Predicated region
  $region10: #{bert_classifier_forward.10} parent=0 // pred_check
    _
  $region11: #{bert_classifier_forward.10} parent=0 // pred_check_branch
    %16 = sbr.rel (0) target = $region13
  $region12: #{bert_classifier_forward.10} parent=0 // pred_region
    _
  $region13: #{bert_classifier_forward.10} parent=0 // pred_fallthru
    _
  %v18 = vld [vmem:[%s0] sm:$0xf]
  %v19 = vld [vmem:[%s0 + $0x4] sm:$0xf]
  %v20 = vld [vmem:[%s1] sm:$0xf]
  %v21 = vld [vmem:[%s1 + $0x4] sm:$0xf]
  %v22 = vld [vmem:[%s1 + $0x8] sm:$0xf]
  %v23 = vld [vmem:[%s1 + $0xc] sm:$0xf]
  %v24 = vld [vmem:[%s2] sm:$0x1]
  %v26 = vperm.slane %v24, 0
  %v30 = vunpack.c.l.b16 %v18
  %v31 = vunpack.c.l.b16 %v19
  %v32 = vpack.c.b16 %v31, %v30
  %v37 = vunpack.c.l.b16 %v20
  %v38 = vunpack.c.l.b16 %v21
  %v39 = vunpack.c.l.b16 %v22
  %v40 = vunpack.c.l.b16 %v23
  %v41 = vpack.c.b16 %v38, %v37
  %v42 = vpack.c.b16 %v40, %v39
  %vm45 = vcmask 261120
  %v47 = vsel %vm45, %v32, 0
  %49 = vmatpush.bf16.msra.mxu0 0
  %50 = vmatpush.bf16.msra.mxu0 0
  %51 = vmatpush.bf16.msra.mxu0 0
  %52 = vmatpush.bf16.msra.mxu0 0
  %53 = vmatpush.bf16.msra.mxu0 0
  %54 = vmatpush.bf16.msra.mxu0 0
  %55 = vmatpush.bf16.msra.mxu0 %v42
  %56 = vmatpush.bf16.msra.mxu0 %v41
  %57 = vmatmul.bf16.gmra.mxu0 %v47
  %v58 = vpop.f32.mrf.mxu0
  %v59 = vadd.f32 %v26, %v58
  %v60 = vpop.f32.mrf.mxu0
  %v61 = vadd.f32 %v26, %v60
  %62 = vdwg.mxu0
  %v63 = vpack.c.bf16 %v59, %v59
  %v64 = vpack.c.bf16 %v61, %v61
  %vm65 = vcmask 257024
  %66 = vst.msk [vmem:[%s3] sm:$0xf] %vm65, %v63
  %67 = vst.msk [vmem:[%s3 + $0x4] sm:$0xf] %vm65, %v64
  %70 = vrot.lane.b32.xlu0 %v63, 96
  %v71 = vpop.permute.xlu0 %70
  %72 = vrot.lane.b32.xlu0 %v64, 96
  %v73 = vpop.permute.xlu0 %72
  %76 = vst.msk [vmem:[%s4] sm:$0xf] %vm65, %v71
  %77 = vst.msk [vmem:[%s4 + $0x4] sm:$0xf] %vm65, %v73
  %78 = vrot.lane.b32.xlu0 %v63, 64
  %v79 = vpop.permute.xlu0 %78
  %80 = vrot.lane.b32.xlu0 %v64, 64
  %v81 = vpop.permute.xlu0 %80
  %84 = vst.msk [vmem:[%s5] sm:$0xf] %vm65, %v79
  %85 = vst.msk [vmem:[%s5 + $0x4] sm:$0xf] %vm65, %v81
  // Predicated region
  $region14: #{bert_classifier_forward.10} parent=0 // pred_check
    _
  $region15: #{bert_classifier_forward.10} parent=0 // pred_check_branch
    %87 = sbr.rel (0) target = $region17
  $region16: #{bert_classifier_forward.10} parent=0 // pred_region
    _
  $region17: #{bert_classifier_forward.10} parent=0 // pred_fallthru
    _
  // Predicated region
  $region18: #{bert_classifier_forward.10} parent=0 // pred_check
    _
  $region19: #{bert_classifier_forward.10} parent=0 // pred_check_branch
    %89 = sbr.rel (0) target = $region21
  $region20: #{bert_classifier_forward.10} parent=0 // pred_region
    _
  $region21: #{bert_classifier_forward.10} parent=0 // pred_fallthru
    _
  // Predicated region
  $region22: #{bert_classifier_forward.10} parent=0 // pred_check
    _
  $region23: #{bert_classifier_forward.10} parent=0 // pred_check_branch
    %91 = sbr.rel (0) target = $region25
  $region24: #{bert_classifier_forward.10} parent=0 // pred_region
    _
  $region25: #{bert_classifier_forward.10} parent=0 // pred_fallthru
    _
  // Predicated region
  $region26: #{bert_classifier_forward.10} parent=0 // pred_check
    _
  $region27: #{bert_classifier_forward.10} parent=0 // pred_check_branch
    %93 = sbr.rel (0) target = $region29
  $region28: #{bert_classifier_forward.10} parent=0 // pred_region
    _
  $region29: #{bert_classifier_forward.10} parent=0 // pred_fallthru
    _
  // Predicated region
  $region30: #{bert_classifier_forward.10} parent=0 // pred_check
    _
  $region31: #{bert_classifier_forward.10} parent=0 // pred_check_branch
    %95 = sbr.rel (0) target = $region33
  $region32: #{bert_classifier_forward.10} parent=0 // pred_region
    _
  $region33: #{bert_classifier_forward.10} parent=0 // pred_fallthru
    _
  // Predicated region
  $region34: #{bert_classifier_forward.10} parent=0 // pred_check
    _
  $region35: #{bert_classifier_forward.10} parent=0 // pred_check_branch
    %97 = sbr.rel (0) target = $region37
  $region36: #{bert_classifier_forward.10} parent=0 // pred_region
    _
  $region37: #{bert_classifier_forward.10} parent=0 // pred_fallthru
    _

// kernel: bert_classifier_forward.9
$region0: #{bert_classifier_forward.9}
  #allocation0 [shape = 'u32[]', space=smem, size = 0x4, offset = 0x4, fixed_abs, tag = 'smem constant byte address 0x4 - core index']
  #allocation1 [shape = 'u32[72,128]{1,0:T(1,128)}', space=vmem, size = 0x9000, scoped, tag = 'internal scratch']
  %s0 = inlined_call_operand.vmem [shape: bf16[16,32], index: 0, kind: input, shape index: {}]
  %s1 = inlined_call_operand.vmem [shape: f32[1,32], index: 1, kind: input, shape index: {}]
  %s2 = inlined_call_operand.vmem [shape: f32[1,32], index: 2, kind: input, shape index: {}]
  %s3 = inlined_call_operand.vmem [shape: bf16[16,32], index: 3, kind: output, shape index: {}]
  %s4 = sld [smem:[#allocation0]]
  $region22: #{bert_classifier_forward.9} parent=0
    _
  %s6 = ssub.s32 1, %s4
  %s7 = scalar_select 0, %s6, %s4
  // Predicated region
  $region2: #{bert_classifier_forward.9} parent=0 // pred_check
    _
  $region3: #{bert_classifier_forward.9} parent=0 // pred_check_branch
    %9 = sbr.rel (0) target = $region5
  $region4: #{bert_classifier_forward.9} parent=0 // pred_region
    _
  $region5: #{bert_classifier_forward.9} parent=0 // pred_fallthru
    _
  // Predicated region
  $region6: #{bert_classifier_forward.9} parent=0 // pred_check
    _
  $region7: #{bert_classifier_forward.9} parent=0 // pred_check_branch
    %11 = sbr.rel (0) target = $region9
  $region8: #{bert_classifier_forward.9} parent=0 // pred_region
    _
  $region9: #{bert_classifier_forward.9} parent=0 // pred_fallthru
    _
  // Predicated region
  $region10: #{bert_classifier_forward.9} parent=0 // pred_check
    _
  $region11: #{bert_classifier_forward.9} parent=0 // pred_check_branch
    %13 = sbr.rel (0) target = $region13
  $region12: #{bert_classifier_forward.9} parent=0 // pred_region
    _
  $region13: #{bert_classifier_forward.9} parent=0 // pred_fallthru
    _
  %v14 = vld [vmem:[%s0] sm:$0xf]
  %v15 = vld [vmem:[%s0 + $0x4] sm:$0xf]
  %v16 = vunpack.c.l.bf16 %v14
  %v17 = vunpack.c.l.bf16 %v15
  %v18 = vld [vmem:[%s1] sm:$0x1]
  %v19 = vld [vmem:[%s2] sm:$0x1]
  %vm20 = vcmask 261120
  %v21 = vsel %vm20, %v16, 0.0
  %22 = vadd.xlane.f32.xlu0 %v21
  %v23 = vpop.xlane.xlu0 %22
  %v24 = vsel %vm20, %v17, 0.0
  %25 = vadd.xlane.f32.xlu0 %v24
  %v26 = vpop.xlane.xlu0 %25
  %v27 = vrcp.pop 32.0
  %v28 = vmul.f32 32.0, %v27
  %v29 = vsub.f32 1.0, %v28
  %v30 = vmul.f32 %v27, %v29
  %v31 = vadd.f32 %v27, %v30
  %vm32 = vweird.f32 %v27
  %v33 = vsel %vm32, %v27, %v31
  %v34 = vmul.f32 %v23, %v33
  %v35 = vmul.f32 %v26, %v33
  %v36 = vsub.f32 %v16, %v34
  %v37 = vsub.f32 %v17, %v35
  %v38 = vmul.f32 %v36, %v36
  %v39 = vmul.f32 %v37, %v37
  %v40 = vsel %vm20, %v38, 0.0
  %41 = vadd.xlane.f32.xlu0 %v40
  %v42 = vpop.xlane.xlu0 %41
  %v43 = vsel %vm20, %v39, 0.0
  %44 = vadd.xlane.f32.xlu0 %v43
  %v45 = vpop.xlane.xlu0 %44
  %v46 = vmul.f32 %v42, %v33
  %v47 = vmul.f32 %v45, %v33
  %v48 = vadd.f32 %v46, 1e-12
  %v49 = vadd.f32 %v47, 1e-12
  %v50 = vrsqrt.pop %v48
  %v51 = vmul.f32 %v50, %v48
  %v52 = vmul.f32 %v51, %v50
  %v53 = vmul.f32 0.5, %v52
  %v54 = vsub.f32 1.5, %v53
  %v55 = vmul.f32 %v50, %v54
  %vm56 = vweird.f32 %v48
  %vm57 = vweird.f32 %v50
  %vm58 = vmor %vm56, %vm57
  %v59 = vsel %vm58, %v50, %v55
  %v60 = vrsqrt.pop %v49
  %v61 = vmul.f32 %v60, %v49
  %v62 = vmul.f32 %v61, %v60
  %v63 = vmul.f32 0.5, %v62
  %v64 = vsub.f32 1.5, %v63
  %v65 = vmul.f32 %v60, %v64
  %vm66 = vweird.f32 %v49
  %vm67 = vweird.f32 %v60
  %vm68 = vmor %vm66, %vm67
  %v69 = vsel %vm68, %v60, %v65
  %v70 = vmul.f32 %v36, %v59
  %v71 = vmul.f32 %v37, %v69
  %v73 = vperm.slane %v18, 0
  %v75 = vmul.f32 %v70, %v73
  %v76 = vmul.f32 %v71, %v73
  %v78 = vperm.slane %v19, 0
  %v80 = vadd.f32 %v75, %v78
  %v81 = vadd.f32 %v76, %v78
  %v82 = vpack.c.bf16 %v80, %v80
  %v83 = vpack.c.bf16 %v81, %v81
  %vm84 = vcmask 257024
  %85 = vst.msk [vmem:[%s3] sm:$0xf] %vm84, %v82
  %86 = vst.msk [vmem:[%s3 + $0x4] sm:$0xf] %vm84, %v83
  // Predicated region
  $region14: #{bert_classifier_forward.9} parent=0 // pred_check
    _
  $region15: #{bert_classifier_forward.9} parent=0 // pred_check_branch
    %88 = sbr.rel (0) target = $region17
  $region16: #{bert_classifier_forward.9} parent=0 // pred_region
    _
  $region17: #{bert_classifier_forward.9} parent=0 // pred_fallthru
    _
  // Predicated region
  $region18: #{bert_classifier_forward.9} parent=0 // pred_check
    _
  $region19: #{bert_classifier_forward.9} parent=0 // pred_check_branch
    %90 = sbr.rel (0) target = $region21
  $region20: #{bert_classifier_forward.9} parent=0 // pred_region
    _
  $region21: #{bert_classifier_forward.9} parent=0 // pred_fallthru
    _

// kernel: bert_classifier_forward.11
$region0: #{bert_classifier_forward.11}
  #allocation0 [shape = 'u32[]', space=smem, size = 0x4, offset = 0x4, fixed_abs, tag = 'smem constant byte address 0x4 - core index']
  #allocation1 [shape = 'u32[72,128]{1,0:T(1,128)}', space=vmem, size = 0x9000, scoped, tag = 'internal scratch']
  #allocation2 [shape = 'f32[4,8,1]{2,1,0:T(8,128)}', space=vmem, size = 0x4000, scoped, tag = 'scratch operand']
  #allocation3 [shape = 'f32[4,8,1]{2,1,0:T(8,128)}', space=vmem, size = 0x4000, scoped, tag = 'scratch operand']
  #allocation4 [shape = 'f32[4,8,8]{2,1,0:T(8,128)}', space=vmem, size = 0x4000, scoped, tag = 'scratch operand']
  %s0 = inlined_call_operand.vmem [shape: f32[2,1,8], index: 0, kind: input, shape index: {}]
  %s1 = inlined_call_operand.vmem [shape: bf16[2,8,32], index: 1, kind: input, shape index: {}]
  %s2 = inlined_call_operand.vmem [shape: bf16[2,8,32], index: 2, kind: input, shape index: {}]
  %s3 = inlined_call_operand.vmem [shape: bf16[2,8,32], index: 3, kind: input, shape index: {}]
  %s4 = inlined_call_operand.vmem [shape: bf16[2,8,32], index: 4, kind: output, shape index: {}]
  %s5 = sld [smem:[#allocation0]]
  $region57: #{bert_classifier_forward.11} parent=0
    _
  %s7 = ssub.s32 1, %s5
  %s8 = scalar_select 0, %s7, %s5
  loop: start=0, step=1, limit=4
  $region2: #{bert_classifier_forward.11} parent=0 // loop_pre_header
    _
  $region3: #{bert_classifier_forward.11} parent=0 // loop_header
    %s10 = sphi 0, %s14
    %p11 = scmp.ge.s32.totalorder %s10, 4
    %s17 = sphi 0, %s36
    %s18 = sphi 0, %s32
    %s19 = sphi 0, %s28
    %s20 = sphi 0, %s17
    %s21 = sphi 0, %s18
    %s22 = sphi 0, %s19
    %s23 = sphi 0, %s20
    %s24 = sphi 0, %s21
    %s25 = sphi 0, %s22
    %s41 = sphi 0, %s43
    %s44 = sphi 0, %s41
    %s45 = sphi 0, %s44
    %s61 = sphi 0, %s45
    %s69 = sphi 0, %s71
    %s72 = sphi 0, %s69
    %s73 = sphi 0, %s72
    %s89 = sphi 0, %s73
    %s97 = sphi 0, %s99
    %s100 = sphi 0, %s97
    %s101 = sphi 0, %s100
    %s117 = sphi 0, %s101
    %s125 = sphi 0, %s127
    %s128 = sphi 0, %s125
    %s129 = sphi 0, %s128
    %s145 = sphi 0, %s129
    %s153 = sphi 0, %s155
    %s156 = sphi 0, %s153
    %s157 = sphi 0, %s156
    %s173 = sphi 0, %s157
  $region4: #{bert_classifier_forward.11} parent=0 // loop_header_branch
    %13 = sbr.rel (%p11) target = $region8
  $region5: #{bert_classifier_forward.11} parent=0 // loop_body
    %s15 = ssub.s32 %s10, 1
    %s16 = ssub.s32 %s10, 2
    %s26 = sadd.s32 1, %s19
    %p27 = scmp.ge.s32.totalorder %s26, 1
    %s28 = scalar_select %p27, 0, %s26
    %s29 = sadd.s32 1, %s18
    %s30 = scalar_select %p27, %s29, %s18
    %p31 = scmp.ge.s32.totalorder %s30, 1
    %s32 = scalar_select %p31, 0, %s30
    %s33 = sadd.s32 1, %s17
    %s34 = scalar_select %p31, %s33, %s17
    %p35 = scmp.ge.s32.totalorder %s34, 2
    %s36 = scalar_select %p35, 0, %s34
    %s37 = ssub.s32 %s17, %s36
    %s38 = ssub.s32 %s19, %s28
    %s39 = sor.u32 %s37, %s38
    %p40 = scmp.eq.s32.totalorder %s39, 0
    %s42 = sadd.s32 %s41, 1
    %s43 = scalar_select %p40, %s41, %s42
    %p46 = pneg %p40
    %p47 = scmp.eq.s32.totalorder %s10, 1
    %p48 = por %p46, %p47
    %p49 = scmp.ne.s32.totalorder %s41, %s44
    %p50 = scmp.eq.s32.totalorder %s10, 0
    %p51 = por %p49, %p50
    %p52 = scmp.ne.s32.totalorder %s41, %s44
    %p53 = scmp.eq.s32.totalorder %s15, 1
    %p54 = por %p52, %p53
    %p55 = scmp.ne.s32.totalorder %s44, %s45
    %p56 = scmp.eq.s32.totalorder %s15, 0
    %p57 = por %p55, %p56
    %p58 = scmp.ne.s32.totalorder %s44, %s45
    %p59 = scmp.eq.s32.totalorder %s16, 1
    %p60 = por %p58, %p59
    %p62 = scmp.ne.s32.totalorder %s45, %s61
    %p63 = scmp.eq.s32.totalorder %s16, 0
    %p64 = por %p62, %p63
    %s65 = ssub.s32 %s17, %s36
    %s66 = ssub.s32 %s18, %s32
    %s67 = sor.u32 %s65, %s66
    %p68 = scmp.eq.s32.totalorder %s67, 0
    %s70 = sadd.s32 %s69, 1
    %s71 = scalar_select %p68, %s69, %s70
    %p74 = pneg %p68
    %p75 = scmp.eq.s32.totalorder %s10, 1
    %p76 = por %p74, %p75
    %p77 = scmp.ne.s32.totalorder %s69, %s72
    %p78 = scmp.eq.s32.totalorder %s10, 0
    %p79 = por %p77, %p78
    %p80 = scmp.ne.s32.totalorder %s69, %s72
    %p81 = scmp.eq.s32.totalorder %s15, 1
    %p82 = por %p80, %p81
    %p83 = scmp.ne.s32.totalorder %s72, %s73
    %p84 = scmp.eq.s32.totalorder %s15, 0
    %p85 = por %p83, %p84
    %p86 = scmp.ne.s32.totalorder %s72, %s73
    %p87 = scmp.eq.s32.totalorder %s16, 1
    %p88 = por %p86, %p87
    %p90 = scmp.ne.s32.totalorder %s73, %s89
    %p91 = scmp.eq.s32.totalorder %s16, 0
    %p92 = por %p90, %p91
    %s93 = ssub.s32 %s17, %s36
    %s94 = ssub.s32 %s19, %s28
    %s95 = sor.u32 %s93, %s94
    %p96 = scmp.eq.s32.totalorder %s95, 0
    %s98 = sadd.s32 %s97, 1
    %s99 = scalar_select %p96, %s97, %s98
    %p102 = pneg %p96
    %p103 = scmp.eq.s32.totalorder %s10, 1
    %p104 = por %p102, %p103
    %p105 = scmp.ne.s32.totalorder %s97, %s100
    %p106 = scmp.eq.s32.totalorder %s10, 0
    %p107 = por %p105, %p106
    %p108 = scmp.ne.s32.totalorder %s97, %s100
    %p109 = scmp.eq.s32.totalorder %s15, 1
    %p110 = por %p108, %p109
    %p111 = scmp.ne.s32.totalorder %s100, %s101
    %p112 = scmp.eq.s32.totalorder %s15, 0
    %p113 = por %p111, %p112
    %p114 = scmp.ne.s32.totalorder %s100, %s101
    %p115 = scmp.eq.s32.totalorder %s16, 1
    %p116 = por %p114, %p115
    %p118 = scmp.ne.s32.totalorder %s101, %s117
    %p119 = scmp.eq.s32.totalorder %s16, 0
    %p120 = por %p118, %p119
    %s121 = ssub.s32 %s17, %s36
    %s122 = ssub.s32 %s19, %s28
    %s123 = sor.u32 %s121, %s122
    %p124 = scmp.eq.s32.totalorder %s123, 0
    %s126 = sadd.s32 %s125, 1
    %s127 = scalar_select %p124, %s125, %s126
    %p130 = pneg %p124
    %p131 = scmp.eq.s32.totalorder %s10, 1
    %p132 = por %p130, %p131
    %p133 = scmp.ne.s32.totalorder %s125, %s128
    %p134 = scmp.eq.s32.totalorder %s10, 0
    %p135 = por %p133, %p134
    %p136 = scmp.ne.s32.totalorder %s125, %s128
    %p137 = scmp.eq.s32.totalorder %s15, 1
    %p138 = por %p136, %p137
    %p139 = scmp.ne.s32.totalorder %s128, %s129
    %p140 = scmp.eq.s32.totalorder %s15, 0
    %p141 = por %p139, %p140
    %p142 = scmp.ne.s32.totalorder %s128, %s129
    %p143 = scmp.eq.s32.totalorder %s16, 1
    %p144 = por %p142, %p143
    %p146 = scmp.ne.s32.totalorder %s129, %s145
    %p147 = scmp.eq.s32.totalorder %s16, 0
    %p148 = por %p146, %p147
    %s149 = ssub.s32 %s17, %s36
    %s150 = ssub.s32 %s18, %s32
    %s151 = sor.u32 %s149, %s150
    %p152 = scmp.eq.s32.totalorder %s151, 0
    %s154 = sadd.s32 %s153, 1
    %s155 = scalar_select %p152, %s153, %s154
    %p158 = pneg %p152
    %p159 = scmp.eq.s32.totalorder %s10, 1
    %p160 = por %p158, %p159
    %p161 = scmp.ne.s32.totalorder %s153, %s156
    %p162 = scmp.eq.s32.totalorder %s10, 0
    %p163 = por %p161, %p162
    %p164 = scmp.ne.s32.totalorder %s153, %s156
    %p165 = scmp.eq.s32.totalorder %s15, 1
    %p166 = por %p164, %p165
    %p167 = scmp.ne.s32.totalorder %s156, %s157
    %p168 = scmp.eq.s32.totalorder %s15, 0
    %p169 = por %p167, %p168
    %p170 = scmp.ne.s32.totalorder %s156, %s157
    %p171 = scmp.eq.s32.totalorder %s16, 1
    %p172 = por %p170, %p171
    %p174 = scmp.ne.s32.totalorder %s157, %s173
    %p175 = scmp.eq.s32.totalorder %s16, 0
    %p176 = por %p174, %p175
    %p177 = scmp.le.s32.totalorder 1, %s10
    %p178 = scmp.lt.s32.totalorder %s10, 3
    %p179 = pnand %p177, %p178
    %p180 = pneg %p179
    // Predicated region
    $region9: #{bert_classifier_forward.11} parent=5 // pred_check
      _
    $region10: #{bert_classifier_forward.11} parent=5 // pred_check_branch
      %182 = sbr.rel (%p179) target = $region12
    $region11: #{bert_classifier_forward.11} parent=5 // pred_region
      %s183 = ssub.s32 %s10, 1
    $region12: #{bert_classifier_forward.11} parent=5 // pred_fallthru
      _
    %p184 = scmp.lt.s32.totalorder %s10, 2
    // Predicated region
    $region13: #{bert_classifier_forward.11} parent=5 // pred_check
      %p185 = pneg %p184
    $region14: #{bert_classifier_forward.11} parent=5 // pred_check_branch
      %187 = sbr.rel (%p185) target = $region16
    $region15: #{bert_classifier_forward.11} parent=5 // pred_region
      // Predicated region
      $region17: #{bert_classifier_forward.11} parent=15 // pred_check
        %p188 = pneg %p51
      $region18: #{bert_classifier_forward.11} parent=15 // pred_check_branch
        %190 = sbr.rel (%p188) target = $region20
      $region19: #{bert_classifier_forward.11} parent=15 // pred_region
        %p191 = scmp.lt.s32.totalorder %s17, 1
        %s192 = scalar_select %p191, %s17, 1
        %p193 = scmp.lt.s32.totalorder %s19, 0
        %s194 = scalar_select %p193, %s19, 0
        %s195 = sadd.s32 %s194, %s192
        %s196 = scalar_lea.vmem %s0, %s195
      $region20: #{bert_classifier_forward.11} parent=15 // pred_fallthru
        _
      // Predicated region
      $region21: #{bert_classifier_forward.11} parent=15 // pred_check
        %p197 = pneg %p79
      $region22: #{bert_classifier_forward.11} parent=15 // pred_check_branch
        %199 = sbr.rel (%p197) target = $region24
      $region23: #{bert_classifier_forward.11} parent=15 // pred_region
        %p200 = scmp.lt.s32.totalorder %s17, 1
        %s201 = scalar_select %p200, %s17, 1
        %p202 = scmp.lt.s32.totalorder %s18, 0
        %s203 = scalar_select %p202, %s18, 0
        %s204 = sadd.s32 %s203, %s201
        %s205 = smul.addr %s204, 4
        %s206 = scalar_lea.vmem %s1, %s205
      $region24: #{bert_classifier_forward.11} parent=15 // pred_fallthru
        _
      // Predicated region
      $region25: #{bert_classifier_forward.11} parent=15 // pred_check
        %p207 = pneg %p107
      $region26: #{bert_classifier_forward.11} parent=15 // pred_check_branch
        %209 = sbr.rel (%p207) target = $region28
      $region27: #{bert_classifier_forward.11} parent=15 // pred_region
        %p210 = scmp.lt.s32.totalorder %s17, 1
        %s211 = scalar_select %p210, %s17, 1
        %p212 = scmp.lt.s32.totalorder %s19, 0
        %s213 = scalar_select %p212, %s19, 0
        %s214 = sadd.s32 %s213, %s211
        %s215 = smul.addr %s214, 4
        %s216 = scalar_lea.vmem %s2, %s215
      $region28: #{bert_classifier_forward.11} parent=15 // pred_fallthru
        _
      // Predicated region
      $region29: #{bert_classifier_forward.11} parent=15 // pred_check
        %p217 = pneg %p135
      $region30: #{bert_classifier_forward.11} parent=15 // pred_check_branch
        %219 = sbr.rel (%p217) target = $region32
      $region31: #{bert_classifier_forward.11} parent=15 // pred_region
        %p220 = scmp.lt.s32.totalorder %s17, 1
        %s221 = scalar_select %p220, %s17, 1
        %p222 = scmp.lt.s32.totalorder %s19, 0
        %s223 = scalar_select %p222, %s19, 0
        %s224 = sadd.s32 %s223, %s221
        %s225 = smul.addr %s224, 4
        %s226 = scalar_lea.vmem %s3, %s225
      $region32: #{bert_classifier_forward.11} parent=15 // pred_fallthru
        _
    $region16: #{bert_classifier_forward.11} parent=5 // pred_fallthru
      _
    %p227 = scmp.le.s32.totalorder 1, %s10
    %p228 = scmp.lt.s32.totalorder %s10, 3
    %p229 = pnand %p227, %p228
    %p230 = pneg %p229
    // Predicated region
    $region33: #{bert_classifier_forward.11} parent=5 // pred_check
      _
    $region34: #{bert_classifier_forward.11} parent=5 // pred_check_branch
      %232 = sbr.rel (%p229) target = $region36
    $region35: #{bert_classifier_forward.11} parent=5 // pred_region
      %s233 = ssub.s32 %s10, 1
      %p234 = scmp.lt.s32.totalorder %s20, 1
      %s235 = scalar_select %p234, %s20, 1
      %p236 = scmp.lt.s32.totalorder %s22, 0
      %s237 = scalar_select %p236, %s22, 0
      %s238 = sadd.s32 %s237, %s235
      %s239 = scalar_lea.vmem %s0, %s238
      %p240 = pneg %p57
      %p241 = pneg %p54
      %p242 = scmp.lt.s32.totalorder %s20, 1
      %s243 = scalar_select %p242, %s20, 1
      %p244 = scmp.lt.s32.totalorder %s21, 0
      %s245 = scalar_select %p244, %s21, 0
      %s246 = sadd.s32 %s245, %s243
      %s247 = smul.addr %s246, 4
      %s248 = scalar_lea.vmem %s1, %s247
      %p249 = pneg %p85
      %p250 = pneg %p82
      %p251 = scmp.lt.s32.totalorder %s20, 1
      %s252 = scalar_select %p251, %s20, 1
      %p253 = scmp.lt.s32.totalorder %s22, 0
      %s254 = scalar_select %p253, %s22, 0
      %s255 = sadd.s32 %s254, %s252
      %s256 = smul.addr %s255, 4
      %s257 = scalar_lea.vmem %s2, %s256
      %p258 = pneg %p113
      %p259 = pneg %p110
      %p260 = scmp.lt.s32.totalorder %s20, 1
      %s261 = scalar_select %p260, %s20, 1
      %p262 = scmp.lt.s32.totalorder %s22, 0
      %s263 = scalar_select %p262, %s22, 0
      %s264 = sadd.s32 %s263, %s261
      %s265 = smul.addr %s264, 4
      %s266 = scalar_lea.vmem %s3, %s265
      %p267 = pneg %p141
      %p268 = pneg %p138
      %p269 = pneg %p169
      %p270 = pneg %p166
      %p271 = scmp.lt.s32.totalorder %s20, 1
      %s272 = scalar_select %p271, %s20, 1
      %p273 = scmp.lt.s32.totalorder %s21, 0
      %s274 = scalar_select %p273, %s21, 0
      %s275 = sadd.s32 %s274, %s272
      %s276 = smul.addr %s275, 4
      %s277 = scalar_lea.vmem %s4, %s276
      %p278 = scmp.lt.s32.totalorder %s20, 1
      %s279 = scalar_select %p278, %s20, 1
      %p280 = scmp.lt.s32.totalorder %s22, 0
      %s281 = scalar_select %p280, %s22, 0
      %s282 = sadd.s32 %s281, %s279
      %s283 = scalar_lea.vmem %s0, %s282
      %p284 = scmp.lt.s32.totalorder %s20, 1
      %s285 = scalar_select %p284, %s20, 1
      %p286 = scmp.lt.s32.totalorder %s21, 0
      %s287 = scalar_select %p286, %s21, 0
      %s288 = sadd.s32 %s287, %s285
      %s289 = smul.addr %s288, 4
      %s290 = scalar_lea.vmem %s1, %s289
      %p291 = scmp.lt.s32.totalorder %s20, 1
      %s292 = scalar_select %p291, %s20, 1
      %p293 = scmp.lt.s32.totalorder %s22, 0
      %s294 = scalar_select %p293, %s22, 0
      %s295 = sadd.s32 %s294, %s292
      %s296 = smul.addr %s295, 4
      %s297 = scalar_lea.vmem %s2, %s296
      %p298 = scmp.lt.s32.totalorder %s20, 1
      %s299 = scalar_select %p298, %s20, 1
      %p300 = scmp.lt.s32.totalorder %s22, 0
      %s301 = scalar_select %p300, %s22, 0
      %s302 = sadd.s32 %s301, %s299
      %s303 = smul.addr %s302, 4
      %s304 = scalar_lea.vmem %s3, %s303
      %p305 = scmp.lt.s32.totalorder %s20, 1
      %s306 = scalar_select %p305, %s20, 1
      %p307 = scmp.lt.s32.totalorder %s21, 0
      %s308 = scalar_select %p307, %s21, 0
      %s309 = sadd.s32 %s308, %s306
      %s310 = smul.addr %s309, 4
      %s311 = scalar_lea.vmem %s4, %s310
      %p313 = scmp.eq.s32.totalorder %s22, 0
      // Predicated region
      $region37: #{bert_classifier_forward.11} parent=35 // pred_check
        %p314 = pneg %p313
      $region38: #{bert_classifier_forward.11} parent=35 // pred_check_branch
        %316 = sbr.rel (%p314) target = $region40
      $region39: #{bert_classifier_forward.11} parent=35 // pred_region
        %vm317 = vcmask 7168
        %318 = vst.msk [vmem:[#allocation2] sm:$0xff] %vm317, -1e+30
        %319 = vst.msk [vmem:[#allocation2 + $0x8] sm:$0xff] %vm317, -1e+30
        %320 = vst.msk [vmem:[#allocation2 + $0x10] sm:$0xff] %vm317, -1e+30
        %321 = vst.msk [vmem:[#allocation2 + $0x18] sm:$0xff] %vm317, -1e+30
        %322 = vst.msk [vmem:[#allocation3] sm:$0xff] %vm317, 0.0
        %323 = vst.msk [vmem:[#allocation3 + $0x8] sm:$0xff] %vm317, 0.0
        %324 = vst.msk [vmem:[#allocation3 + $0x10] sm:$0xff] %vm317, 0.0
        %325 = vst.msk [vmem:[#allocation3 + $0x18] sm:$0xff] %vm317, 0.0
        %vm326 = vcmask 64512
        %327 = vst.msk [vmem:[#allocation4] sm:$0xff] %vm326, 0.0
        %328 = vst.msk [vmem:[#allocation4 + $0x8] sm:$0xff] %vm326, 0.0
        %329 = vst.msk [vmem:[#allocation4 + $0x10] sm:$0xff] %vm326, 0.0
        %330 = vst.msk [vmem:[#allocation4 + $0x18] sm:$0xff] %vm326, 0.0
      $region40: #{bert_classifier_forward.11} parent=35 // pred_fallthru
        _
      %v331 = vld [vmem:[%s283] sm:$0x1]
      %v332 = vld [vmem:[%s290] sm:$0xf]
      %v333 = vunpack.c.l.bf16 %v332
      %v334 = vmul.f32 %v333, 0.35351563
      %v335 = vpack.c.bf16 %v334, %v334
      %v336 = vld [vmem:[%s297] sm:$0xf]
      %v337 = vld [vmem:[%s304] sm:$0xf]
      %v339 = vperm.slane %v331, 0
      %vm341 = vcmask 64512
      %v343 = vsel %vm341, %v335, 0
      %v346 = vsel %vm341, %v336, 0
      %348 = vmatpush.bf16.xpose.msra.mxu0 0
      %349 = vmatpush.bf16.xpose.msra.mxu0 0
      %350 = vmatpush.bf16.xpose.msra.mxu0 0
      %351 = vmatpush.bf16.xpose.msra.mxu0 0
      %352 = vmatpush.bf16.xpose.msra.mxu0 0
      %353 = vmatpush.bf16.xpose.msra.mxu0 0
      %354 = vmatpush.bf16.xpose.msra.mxu0 0
      %355 = vmatpush.bf16.xpose.msra.mxu0 %v346
      %356 = vmatmul.bf16.gmra.mxu0 %v343
      %v357 = vpop.f32.mrf.mxu0
      %v358 = vadd.f32 %v339, %v357
      %v359 = vpop.f32.mrf.mxu0
      %360 = vdwg.mxu0
      %v361 = vld [vmem:[#allocation2] sm:$0xff]
      %v362 = vsel %vm341, %v358, -inf
      %363 = vmax.xlane.f32.xlu0 %v362
      %v364 = vpop.xlane.xlu0 %363
      %v365 = vmax.f32 %v361, %v364
      %v366 = vsub.f32 %v361, %v365
      %v367 = vmul.f32 %v366, 1.442695
      %v368 = vpow.pop %v367
      %370 = vset.pattern.permute.xlu0 0
      %371 = vperm.xlu0 %370, %v365
      %v372 = vpop.permute.xlu0 %371
      %v374 = vsub.f32 %v358, %v372
      %v375 = vmul.f32 %v374, 1.442695
      %v376 = vpow.pop %v375
      %v377 = vld [vmem:[#allocation3] sm:$0xff]
      %v378 = vmul.f32 %v368, %v377
      %v379 = vsel %vm341, %v376, 0.0
      %380 = vadd.xlane.f32.xlu0 %v379
      %v381 = vpop.xlane.xlu0 %380
      %v382 = vadd.f32 %v378, %v381
      %vm383 = vcmask 7168
      %384 = vst.msk [vmem:[#allocation3] sm:$0xff] %vm383, %v382
      %v385 = vld [vmem:[#allocation4] sm:$0xff]
      %387 = vset.pattern.permute.xlu0 0
      %388 = vperm.xlu0 %387, %v368
      %v389 = vpop.permute.xlu0 %388
      %v391 = vmul.f32 %v389, %v385
      %v392 = vpack.c.bf16 %v376, %v376
      %v394 = vsel %vm341, %v392, 0
      %vm396 = vcmask 1043456
      %v398 = vsel %vm396, %v337, 0
      %400 = vmatpush.bf16.msra.mxu0 0
      %401 = vmatpush.bf16.msra.mxu0 0
      %402 = vmatpush.bf16.msra.mxu0 0
      %403 = vmatpush.bf16.msra.mxu0 0
      %404 = vmatpush.bf16.msra.mxu0 0
      %405 = vmatpush.bf16.msra.mxu0 0
      %406 = vmatpush.bf16.msra.mxu0 0
      %407 = vmatpush.bf16.msra.mxu0 %v398
      %408 = vmatmul.bf16.gmra.mxu0 %v394
      %v409 = vpop.f32.mrf.mxu0
      %v410 = vadd.f32 0.0, %v409
      %v411 = vpop.f32.mrf.mxu0
      %412 = vdwg.mxu0
      %v413 = vadd.f32 %v391, %v410
      %414 = vst.msk [vmem:[#allocation4] sm:$0xff] %vm341, %v413
      %415 = vst.msk [vmem:[#allocation2] sm:$0xff] %vm383, %v365
      %v416 = vld [vmem:[%s290] sm:$0xf]
      %v417 = vunpack.c.l.bf16 %v416
      %v418 = vmul.f32 %v417, 0.35351563
      %v419 = vpack.c.bf16 %v418, %v418
      %v420 = vld [vmem:[%s297] sm:$0xf]
      %v421 = vld [vmem:[%s304] sm:$0xf]
      %423 = vrot.lane.b32.xlu0 %v419, 120
      %v424 = vpop.permute.xlu0 %423
      %v426 = vunpack.c.l.b16 %v420
      %v427 = vpack.c.b16 %v426, %v426
      %428 = vrot.lane.b32.xlu0 %v427, 120
      %v429 = vpop.permute.xlu0 %428
      %v431 = vsel %vm341, %v424, 0
      %v434 = vsel %vm341, %v429, 0
      %436 = vmatpush.bf16.xpose.msra.mxu0 0
      %437 = vmatpush.bf16.xpose.msra.mxu0 0
      %438 = vmatpush.bf16.xpose.msra.mxu0 0
      %439 = vmatpush.bf16.xpose.msra.mxu0 0
      %440 = vmatpush.bf16.xpose.msra.mxu0 0
      %441 = vmatpush.bf16.xpose.msra.mxu0 0
      %442 = vmatpush.bf16.xpose.msra.mxu0 0
      %443 = vmatpush.bf16.xpose.msra.mxu0 %v434
      %444 = vmatmul.bf16.gmra.mxu0 %v431
      %v445 = vpop.f32.mrf.mxu0
      %v446 = vadd.f32 %v339, %v445
      %v447 = vpop.f32.mrf.mxu0
      %448 = vdwg.mxu0
      %s449 = scalar_lea.vmem [#allocation2], 8
      %v450 = vld [vmem:[%s449] sm:$0xff]
      %v451 = vsel %vm341, %v446, -inf
      %452 = vmax.xlane.f32.xlu0 %v451
      %v453 = vpop.xlane.xlu0 %452
      %v454 = vmax.f32 %v450, %v453
      %v455 = vsub.f32 %v450, %v454
      %v456 = vmul.f32 %v455, 1.442695
      %v457 = vpow.pop %v456
      %459 = vset.pattern.permute.xlu0 0
      %460 = vperm.xlu0 %459, %v454
      %v461 = vpop.permute.xlu0 %460
      %v463 = vsub.f32 %v446, %v461
      %v464 = vmul.f32 %v463, 1.442695
      %v465 = vpow.pop %v464
      %s466 = scalar_lea.vmem [#allocation3], 8
      %v467 = vld [vmem:[%s466] sm:$0xff]
      %v468 = vmul.f32 %v457, %v467
      %v469 = vsel %vm341, %v465, 0.0
      %470 = vadd.xlane.f32.xlu0 %v469
      %v471 = vpop.xlane.xlu0 %470
      %v472 = vadd.f32 %v468, %v471
      %473 = vst.msk [vmem:[%s466] sm:$0xff] %vm383, %v472
      %s474 = scalar_lea.vmem [#allocation4], 8
      %v475 = vld [vmem:[%s474] sm:$0xff]
      %477 = vset.pattern.permute.xlu0 0
      %478 = vperm.xlu0 %477, %v457
      %v479 = vpop.permute.xlu0 %478
      %v481 = vmul.f32 %v479, %v475
      %v482 = vpack.c.bf16 %v465, %v465
      %v484 = vunpack.c.l.b16 %v421
      %v485 = vpack.c.b16 %v484, %v484
      %486 = vrot.lane.b32.xlu0 %v485, 120
      %v487 = vpop.permute.xlu0 %486
      %v489 = vsel %vm341, %v482, 0
      %v492 = vsel %vm396, %v487, 0
      %494 = vmatpush.bf16.msra.mxu0 0
      %495 = vmatpush.bf16.msra.mxu0 0
      %496 = vmatpush.bf16.msra.mxu0 0
      %497 = vmatpush.bf16.msra.mxu0 0
      %498 = vmatpush.bf16.msra.mxu0 0
      %499 = vmatpush.bf16.msra.mxu0 0
      %500 = vmatpush.bf16.msra.mxu0 0
      %501 = vmatpush.bf16.msra.mxu0 %v492
      %502 = vmatmul.bf16.gmra.mxu0 %v489
      %v503 = vpop.f32.mrf.mxu0
      %v504 = vadd.f32 0.0, %v503
      %v505 = vpop.f32.mrf.mxu0
      %506 = vdwg.mxu0
      %v507 = vadd.f32 %v481, %v504
      %508 = vst.msk [vmem:[%s474] sm:$0xff] %vm341, %v507
      %509 = vst.msk [vmem:[%s449] sm:$0xff] %vm383, %v454
      %v510 = vld [vmem:[%s290] sm:$0xf]
      %v511 = vunpack.c.l.bf16 %v510
      %v512 = vmul.f32 %v511, 0.35351563
      %v513 = vpack.c.bf16 %v512, %v512
      %v514 = vld [vmem:[%s297] sm:$0xf]
      %v515 = vld [vmem:[%s304] sm:$0xf]
      %517 = vrot.lane.b32.xlu0 %v513, 112
      %v518 = vpop.permute.xlu0 %517
      %v520 = vunpack.c.l.b16 %v514
      %v521 = vpack.c.b16 %v520, %v520
      %522 = vrot.lane.b32.xlu0 %v521, 112
      %v523 = vpop.permute.xlu0 %522
      %v525 = vsel %vm341, %v518, 0
      %v528 = vsel %vm341, %v523, 0
      %530 = vmatpush.bf16.xpose.msra.mxu0 0
      %531 = vmatpush.bf16.xpose.msra.mxu0 0
      %532 = vmatpush.bf16.xpose.msra.mxu0 0
      %533 = vmatpush.bf16.xpose.msra.mxu0 0
      %534 = vmatpush.bf16.xpose.msra.mxu0 0
      %535 = vmatpush.bf16.xpose.msra.mxu0 0
      %536 = vmatpush.bf16.xpose.msra.mxu0 0
      %537 = vmatpush.bf16.xpose.msra.mxu0 %v528
      %538 = vmatmul.bf16.gmra.mxu0 %v525
      %v539 = vpop.f32.mrf.mxu0
      %v540 = vadd.f32 %v339, %v539
      %v541 = vpop.f32.mrf.mxu0
      %542 = vdwg.mxu0
      %s543 = scalar_lea.vmem [#allocation2], 16
      %v544 = vld [vmem:[%s543] sm:$0xff]
      %v545 = vsel %vm341, %v540, -inf
      %546 = vmax.xlane.f32.xlu0 %v545
      %v547 = vpop.xlane.xlu0 %546
      %v548 = vmax.f32 %v544, %v547
      %v549 = vsub.f32 %v544, %v548
      %v550 = vmul.f32 %v549, 1.442695
      %v551 = vpow.pop %v550
      %553 = vset.pattern.permute.xlu0 0
      %554 = vperm.xlu0 %553, %v548
      %v555 = vpop.permute.xlu0 %554
      %v557 = vsub.f32 %v540, %v555
      %v558 = vmul.f32 %v557, 1.442695
      %v559 = vpow.pop %v558
      %s560 = scalar_lea.vmem [#allocation3], 16
      %v561 = vld [vmem:[%s560] sm:$0xff]
      %v562 = vmul.f32 %v551, %v561
      %v563 = vsel %vm341, %v559, 0.0
      %564 = vadd.xlane.f32.xlu0 %v563
      %v565 = vpop.xlane.xlu0 %564
      %v566 = vadd.f32 %v562, %v565
      %567 = vst.msk [vmem:[%s560] sm:$0xff] %vm383, %v566
      %s568 = scalar_lea.vmem [#allocation4], 16
      %v569 = vld [vmem:[%s568] sm:$0xff]
      %571 = vset.pattern.permute.xlu0 0
      %572 = vperm.xlu0 %571, %v551
      %v573 = vpop.permute.xlu0 %572
      %v575 = vmul.f32 %v573, %v569
      %v576 = vpack.c.bf16 %v559, %v559
      %v578 = vunpack.c.l.b16 %v515
      %v579 = vpack.c.b16 %v578, %v578
      %580 = vrot.lane.b32.xlu0 %v579, 112
      %v581 = vpop.permute.xlu0 %580
      %v583 = vsel %vm341, %v576, 0
      %v586 = vsel %vm396, %v581, 0
      %588 = vmatpush.bf16.msra.mxu0 0
      %589 = vmatpush.bf16.msra.mxu0 0
      %590 = vmatpush.bf16.msra.mxu0 0
      %591 = vmatpush.bf16.msra.mxu0 0
      %592 = vmatpush.bf16.msra.mxu0 0
      %593 = vmatpush.bf16.msra.mxu0 0
      %594 = vmatpush.bf16.msra.mxu0 0
      %595 = vmatpush.bf16.msra.mxu0 %v586
      %596 = vmatmul.bf16.gmra.mxu0 %v583
      %v597 = vpop.f32.mrf.mxu0
      %v598 = vadd.f32 0.0, %v597
      %v599 = vpop.f32.mrf.mxu0
      %600 = vdwg.mxu0
      %v601 = vadd.f32 %v575, %v598
      %602 = vst.msk [vmem:[%s568] sm:$0xff] %vm341, %v601
      %603 = vst.msk [vmem:[%s543] sm:$0xff] %vm383, %v548
      %v604 = vld [vmem:[%s290] sm:$0xf]
      %v605 = vunpack.c.l.bf16 %v604
      %v606 = vmul.f32 %v605, 0.35351563
      %v607 = vpack.c.bf16 %v606, %v606
      %v608 = vld [vmem:[%s297] sm:$0xf]
      %v609 = vld [vmem:[%s304] sm:$0xf]
      %611 = vrot.lane.b32.xlu0 %v607, 104
      %v612 = vpop.permute.xlu0 %611
      %v614 = vunpack.c.l.b16 %v608
      %v615 = vpack.c.b16 %v614, %v614
      %616 = vrot.lane.b32.xlu0 %v615, 104
      %v617 = vpop.permute.xlu0 %616
      %v619 = vsel %vm341, %v612, 0
      %v622 = vsel %vm341, %v617, 0
      %624 = vmatpush.bf16.xpose.msra.mxu0 0
      %625 = vmatpush.bf16.xpose.msra.mxu0 0
      %626 = vmatpush.bf16.xpose.msra.mxu0 0
      %627 = vmatpush.bf16.xpose.msra.mxu0 0
      %628 = vmatpush.bf16.xpose.msra.mxu0 0
      %629 = vmatpush.bf16.xpose.msra.mxu0 0
      %630 = vmatpush.bf16.xpose.msra.mxu0 0
      %631 = vmatpush.bf16.xpose.msra.mxu0 %v622
      %632 = vmatmul.bf16.gmra.mxu0 %v619
      %v633 = vpop.f32.mrf.mxu0
      %v634 = vadd.f32 %v339, %v633
      %v635 = vpop.f32.mrf.mxu0
      %636 = vdwg.mxu0
      %s637 = scalar_lea.vmem [#allocation2], 24
      %v638 = vld [vmem:[%s637] sm:$0xff]
      %v639 = vsel %vm341, %v634, -inf
      %640 = vmax.xlane.f32.xlu0 %v639
      %v641 = vpop.xlane.xlu0 %640
      %v642 = vmax.f32 %v638, %v641
      %v643 = vsub.f32 %v638, %v642
      %v644 = vmul.f32 %v643, 1.442695
      %v645 = vpow.pop %v644
      %647 = vset.pattern.permute.xlu0 0
      %648 = vperm.xlu0 %647, %v642
      %v649 = vpop.permute.xlu0 %648
      %v651 = vsub.f32 %v634, %v649
      %v652 = vmul.f32 %v651, 1.442695
      %v653 = vpow.pop %v652
      %s654 = scalar_lea.vmem [#allocation3], 24
      %v655 = vld [vmem:[%s654] sm:$0xff]
      %v656 = vmul.f32 %v645, %v655
      %v657 = vsel %vm341, %v653, 0.0
      %658 = vadd.xlane.f32.xlu0 %v657
      %v659 = vpop.xlane.xlu0 %658
      %v660 = vadd.f32 %v656, %v659
      %661 = vst.msk [vmem:[%s654] sm:$0xff] %vm383, %v660
      %s662 = scalar_lea.vmem [#allocation4], 24
      %v663 = vld [vmem:[%s662] sm:$0xff]
      %665 = vset.pattern.permute.xlu0 0
      %666 = vperm.xlu0 %665, %v645
      %v667 = vpop.permute.xlu0 %666
      %v669 = vmul.f32 %v667, %v663
      %v670 = vpack.c.bf16 %v653, %v653
      %v672 = vunpack.c.l.b16 %v609
      %v673 = vpack.c.b16 %v672, %v672
      %674 = vrot.lane.b32.xlu0 %v673, 104
      %v675 = vpop.permute.xlu0 %674
      %v677 = vsel %vm341, %v670, 0
      %v680 = vsel %vm396, %v675, 0
      %682 = vmatpush.bf16.msra.mxu0 0
      %683 = vmatpush.bf16.msra.mxu0 0
      %684 = vmatpush.bf16.msra.mxu0 0
      %685 = vmatpush.bf16.msra.mxu0 0
      %686 = vmatpush.bf16.msra.mxu0 0
      %687 = vmatpush.bf16.msra.mxu0 0
      %688 = vmatpush.bf16.msra.mxu0 0
      %689 = vmatpush.bf16.msra.mxu0 %v680
      %690 = vmatmul.bf16.gmra.mxu0 %v677
      %v691 = vpop.f32.mrf.mxu0
      %v692 = vadd.f32 0.0, %v691
      %v693 = vpop.f32.mrf.mxu0
      %694 = vdwg.mxu0
      %v695 = vadd.f32 %v669, %v692
      %696 = vst.msk [vmem:[%s662] sm:$0xff] %vm341, %v695
      %697 = vst.msk [vmem:[%s637] sm:$0xff] %vm383, %v642
      // Predicated region
      $region41: #{bert_classifier_forward.11} parent=35 // pred_check
        %p698 = pneg %p313
      $region42: #{bert_classifier_forward.11} parent=35 // pred_check_branch
        %700 = sbr.rel (%p698) target = $region44
      $region43: #{bert_classifier_forward.11} parent=35 // pred_region
        %v701 = vld [vmem:[#allocation3] sm:$0xff]
        %v702 = vrcp.pop %v701
        %v703 = vld [vmem:[#allocation4] sm:$0xff]
        %705 = vset.pattern.permute.xlu0 0
        %706 = vperm.xlu0 %705, %v702
        %v707 = vpop.permute.xlu0 %706
        %v709 = vmul.f32 %v703, %v707
        %v710 = vpack.c.bf16 %v709, %v709
        %vm711 = vcmask 60416
        %712 = vst.msk [vmem:[%s311] sm:$0xf] %vm711, %v710
        %v713 = vld [vmem:[%s466] sm:$0xff]
        %v714 = vrcp.pop %v713
        %v715 = vld [vmem:[%s474] sm:$0xff]
        %717 = vset.pattern.permute.xlu0 0
        %718 = vperm.xlu0 %717, %v714
        %v719 = vpop.permute.xlu0 %718
        %v721 = vmul.f32 %v715, %v719
        %v722 = vpack.c.bf16 %v721, %v721
        %724 = vrot.lane.b32.xlu0 %v722, 8
        %v725 = vpop.permute.xlu0 %724
        %vm727 = vcmask 126016
        %728 = vst.msk [vmem:[%s311] sm:$0xf] %vm727, %v725
        %v729 = vld [vmem:[%s560] sm:$0xff]
        %v730 = vrcp.pop %v729
        %v731 = vld [vmem:[%s568] sm:$0xff]
        %733 = vset.pattern.permute.xlu0 0
        %734 = vperm.xlu0 %733, %v730
        %v735 = vpop.permute.xlu0 %734
        %v737 = vmul.f32 %v731, %v735
        %v738 = vpack.c.bf16 %v737, %v737
        %740 = vrot.lane.b32.xlu0 %v738, 16
        %v741 = vpop.permute.xlu0 %740
        %vm743 = vcmask 191616
        %744 = vst.msk [vmem:[%s311] sm:$0xf] %vm743, %v741
        %v745 = vld [vmem:[%s654] sm:$0xff]
        %v746 = vrcp.pop %v745
        %v747 = vld [vmem:[%s662] sm:$0xff]
        %749 = vset.pattern.permute.xlu0 0
        %750 = vperm.xlu0 %749, %v746
        %v751 = vpop.permute.xlu0 %750
        %v753 = vmul.f32 %v747, %v751
        %v754 = vpack.c.bf16 %v753, %v753
        %756 = vrot.lane.b32.xlu0 %v754, 24
        %v757 = vpop.permute.xlu0 %756
        %vm759 = vcmask 257216
        %760 = vst.msk [vmem:[%s311] sm:$0xf] %vm759, %v757
      $region44: #{bert_classifier_forward.11} parent=35 // pred_fallthru
        _
      %p761 = scmp.lt.s32.totalorder %s20, 1
      %s762 = scalar_select %p761, %s20, 1
      %p763 = scmp.lt.s32.totalorder %s21, 0
      %s764 = scalar_select %p763, %s21, 0
      %s765 = sadd.s32 %s764, %s762
      %s766 = smul.addr %s765, 4
      %s767 = scalar_lea.vmem %s4, %s766
      // Predicated region
      $region45: #{bert_classifier_forward.11} parent=35 // pred_check
        %p768 = pneg %p166
      $region46: #{bert_classifier_forward.11} parent=35 // pred_check_branch
        %770 = sbr.rel (%p768) target = $region48
      $region47: #{bert_classifier_forward.11} parent=35 // pred_region
        _
      $region48: #{bert_classifier_forward.11} parent=35 // pred_fallthru
        _
    $region36: #{bert_classifier_forward.11} parent=5 // pred_fallthru
      _
    %p771 = scmp.le.s32.totalorder 2, %s10
    // Predicated region
    $region49: #{bert_classifier_forward.11} parent=5 // pred_check
      %p772 = pneg %p771
    $region50: #{bert_classifier_forward.11} parent=5 // pred_check_branch
      %774 = sbr.rel (%p772) target = $region52
    $region51: #{bert_classifier_forward.11} parent=5 // pred_region
      %s775 = ssub.s32 %s10, 2
      // Predicated region
      $region53: #{bert_classifier_forward.11} parent=51 // pred_check
        %p776 = pneg %p172
      $region54: #{bert_classifier_forward.11} parent=51 // pred_check_branch
        %778 = sbr.rel (%p776) target = $region56
      $region55: #{bert_classifier_forward.11} parent=51 // pred_region
        %p779 = scmp.lt.s32.totalorder %s23, 1
        %s780 = scalar_select %p779, %s23, 1
        %p781 = scmp.lt.s32.totalorder %s24, 0
        %s782 = scalar_select %p781, %s24, 0
        %s783 = sadd.s32 %s782, %s780
        %s784 = smul.addr %s783, 4
        %s785 = scalar_lea.vmem %s4, %s784
      $region56: #{bert_classifier_forward.11} parent=51 // pred_fallthru
        _
    $region52: #{bert_classifier_forward.11} parent=5 // pred_fallthru
      _
  $region6: #{bert_classifier_forward.11} parent=0 // loop_footer
    %s14 = sadd.s32 1, %s10
  $region7: #{bert_classifier_forward.11} parent=0 // loop_footer_branch
    %9 = sbr.rel target = $region3
  $region8: #{bert_classifier_forward.11} parent=0 // loop_exit
    _

// kernel: bert_classifier_forward.13
$region0: #{bert_classifier_forward.13}
  #allocation0 [shape = 'u32[]', space=smem, size = 0x4, offset = 0x4, fixed_abs, tag = 'smem constant byte address 0x4 - core index']
  #allocation1 [shape = 'u32[72,128]{1,0:T(1,128)}', space=vmem, size = 0x9000, scoped, tag = 'internal scratch']
  #allocation2 [shape = 'f32[16,32]{1,0:T(8,128)}', space=vmem, size = 0x2000, scoped, tag = 'scratch operand']
  %s0 = inlined_call_operand.vmem [shape: bf16[16,32], index: 0, kind: input, shape index: {}]
  %s1 = inlined_call_operand.vmem [shape: bf16[32,64], index: 1, kind: input, shape index: {}]
  %s2 = inlined_call_operand.vmem [shape: f32[1,64], index: 2, kind: input, shape index: {}]
  %s3 = inlined_call_operand.vmem [shape: bf16[64,32], index: 3, kind: input, shape index: {}]
  %s4 = inlined_call_operand.vmem [shape: f32[1,32], index: 4, kind: input, shape index: {}]
  %s5 = inlined_call_operand.vmem [shape: f32[1,32], index: 5, kind: input, shape index: {}]
  %s6 = inlined_call_operand.vmem [shape: f32[1,32], index: 6, kind: input, shape index: {}]
  %s7 = inlined_call_operand.vmem [shape: bf16[16,32], index: 7, kind: output, shape index: {}]
  %s8 = sld [smem:[#allocation0]]
  $region46: #{bert_classifier_forward.13} parent=0
    _
  %s10 = ssub.s32 1, %s8
  %s11 = scalar_select 0, %s10, %s8
  // Predicated region
  $region2: #{bert_classifier_forward.13} parent=0 // pred_check
    _
  $region3: #{bert_classifier_forward.13} parent=0 // pred_check_branch
    %13 = sbr.rel (0) target = $region5
  $region4: #{bert_classifier_forward.13} parent=0 // pred_region
    _
  $region5: #{bert_classifier_forward.13} parent=0 // pred_fallthru
    _
  // Predicated region
  $region6: #{bert_classifier_forward.13} parent=0 // pred_check
    _
  $region7: #{bert_classifier_forward.13} parent=0 // pred_check_branch
    %15 = sbr.rel (0) target = $region9
  $region8: #{bert_classifier_forward.13} parent=0 // pred_region
    _
  $region9: #{bert_classifier_forward.13} parent=0 // pred_fallthru
    _
  // Predicated region
  $region10: #{bert_classifier_forward.13} parent=0 // pred_check
    _
  $region11: #{bert_classifier_forward.13} parent=0 // pred_check_branch
    %17 = sbr.rel (0) target = $region13
  $region12: #{bert_classifier_forward.13} parent=0 // pred_region
    _
  $region13: #{bert_classifier_forward.13} parent=0 // pred_fallthru
    _
  // Predicated region
  $region14: #{bert_classifier_forward.13} parent=0 // pred_check
    _
  $region15: #{bert_classifier_forward.13} parent=0 // pred_check_branch
    %19 = sbr.rel (0) target = $region17
  $region16: #{bert_classifier_forward.13} parent=0 // pred_region
    _
  $region17: #{bert_classifier_forward.13} parent=0 // pred_fallthru
    _
  // Predicated region
  $region18: #{bert_classifier_forward.13} parent=0 // pred_check
    _
  $region19: #{bert_classifier_forward.13} parent=0 // pred_check_branch
    %21 = sbr.rel (0) target = $region21
  $region20: #{bert_classifier_forward.13} parent=0 // pred_region
    _
  $region21: #{bert_classifier_forward.13} parent=0 // pred_fallthru
    _
  // Predicated region
  $region22: #{bert_classifier_forward.13} parent=0 // pred_check
    _
  $region23: #{bert_classifier_forward.13} parent=0 // pred_check_branch
    %23 = sbr.rel (0) target = $region25
  $region24: #{bert_classifier_forward.13} parent=0 // pred_region
    _
  $region25: #{bert_classifier_forward.13} parent=0 // pred_fallthru
    _
  // Predicated region
  $region26: #{bert_classifier_forward.13} parent=0 // pred_check
    _
  $region27: #{bert_classifier_forward.13} parent=0 // pred_check_branch
    %25 = sbr.rel (0) target = $region29
  $region28: #{bert_classifier_forward.13} parent=0 // pred_region
    _
  $region29: #{bert_classifier_forward.13} parent=0 // pred_fallthru
    _
  %p27 = scmp.eq.s32.totalorder 0, 0
  // Predicated region
  $region30: #{bert_classifier_forward.13} parent=0 // pred_check
    %p28 = pneg %p27
  $region31: #{bert_classifier_forward.13} parent=0 // pred_check_branch
    %30 = sbr.rel (%p28) target = $region33
  $region32: #{bert_classifier_forward.13} parent=0 // pred_region
    %vm31 = vcmask 261120
    %32 = vst.msk [vmem:[#allocation2] sm:$0xff] %vm31, 0.0
    %33 = vst.msk [vmem:[#allocation2 + $0x8] sm:$0xff] %vm31, 0.0
  $region33: #{bert_classifier_forward.13} parent=0 // pred_fallthru
    _
  %v34 = vld [vmem:[%s0] sm:$0xf]
  %v35 = vld [vmem:[%s0 + $0x4] sm:$0xf]
  %v36 = vld [vmem:[%s1] sm:$0xf]
  %v37 = vld [vmem:[%s1 + $0x4] sm:$0xf]
  %v38 = vld [vmem:[%s1 + $0x8] sm:$0xf]
  %v39 = vld [vmem:[%s1 + $0xc] sm:$0xf]
  %v40 = vld [vmem:[%s2] sm:$0x1]
  %v42 = vperm.slane %v40, 0
  %v46 = vunpack.c.l.b16 %v34
  %v47 = vunpack.c.l.b16 %v35
  %v48 = vpack.c.b16 %v47, %v46
  %v53 = vunpack.c.l.b16 %v36
  %v54 = vunpack.c.l.b16 %v37
  %v55 = vunpack.c.l.b16 %v38
  %v56 = vunpack.c.l.b16 %v39
  %v57 = vpack.c.b16 %v54, %v53
  %v58 = vpack.c.b16 %v56, %v55
  %vm61 = vcmask 261120
  %v63 = vsel %vm61, %v48, 0
  %65 = vmatpush.bf16.msra.mxu0 0
  %66 = vmatpush.bf16.msra.mxu0 0
  %67 = vmatpush.bf16.msra.mxu0 0
  %68 = vmatpush.bf16.msra.mxu0 0
  %69 = vmatpush.bf16.msra.mxu0 0
  %70 = vmatpush.bf16.msra.mxu0 0
  %71 = vmatpush.bf16.msra.mxu0 %v58
  %72 = vmatpush.bf16.msra.mxu0 %v57
  %73 = vmatmul.bf16.gmra.mxu0 %v63
  %v74 = vpop.f32.mrf.mxu0
  %v75 = vadd.f32 %v42, %v74
  %v76 = vpop.f32.mrf.mxu0
  %v77 = vadd.f32 %v42, %v76
  %78 = vdwg.mxu0
  %v79 = vmul.f32 %v75, 0.5
  %v80 = vmul.f32 %v77, 0.5
  %v81 = vmul.f32 %v75, 0.044715
  %v82 = vmul.f32 %v77, 0.044715
  %v83 = vmul.f32 %v81, %v75
  %v84 = vmul.f32 %v82, %v77
  %v85 = vmul.f32 %v83, %v75
  %v86 = vmul.f32 %v84, %v77
  %v87 = vadd.f32 %v75, %v85
  %v88 = vadd.f32 %v77, %v86
  %v89 = vmul.f32 %v87, 0.7978846
  %v90 = vmul.f32 %v88, 0.7978846
  %v91 = vtanh.pop %v89
  %v92 = vtanh.pop %v90
  %v93 = vadd.f32 %v91, 1.0
  %v94 = vadd.f32 %v92, 1.0
  %v95 = vmul.f32 %v79, %v93
  %v96 = vmul.f32 %v80, %v94
  %v97 = vld [vmem:[#allocation2] sm:$0xff]
  %v98 = vld [vmem:[#allocation2 + $0x8] sm:$0xff]
  %v99 = vpack.c.bf16 %v96, %v95
  %v100 = vld [vmem:[%s3] sm:$0xf]
  %v101 = vld [vmem:[%s3 + $0x4] sm:$0xf]
  %v102 = vld [vmem:[%s3 + $0x8] sm:$0xf]
  %v103 = vld [vmem:[%s3 + $0xc] sm:$0xf]
  %v104 = vld [vmem:[%s3 + $0x10] sm:$0xf]
  %v105 = vld [vmem:[%s3 + $0x14] sm:$0xf]
  %v106 = vld [vmem:[%s3 + $0x18] sm:$0xf]
  %v107 = vld [vmem:[%s3 + $0x1c] sm:$0xf]
  %v116 = vunpack.c.l.b16 %v100
  %v117 = vunpack.c.l.b16 %v101
  %v118 = vunpack.c.l.b16 %v102
  %v119 = vunpack.c.l.b16 %v103
  %v120 = vunpack.c.l.b16 %v104
  %v121 = vunpack.c.l.b16 %v105
  %v122 = vunpack.c.l.b16 %v106
  %v123 = vunpack.c.l.b16 %v107
  %v124 = vpack.c.b16 %v117, %v116
  %v125 = vpack.c.b16 %v119, %v118
  %v126 = vpack.c.b16 %v121, %v120
  %v127 = vpack.c.b16 %v123, %v122
  %vm132 = vcmask 523264
  %v134 = vsel %vm132, %v99, 0
  %136 = vmatpush.bf16.msra.mxu0 0
  %137 = vmatpush.bf16.msra.mxu0 0
  %138 = vmatpush.bf16.msra.mxu0 0
  %139 = vmatpush.bf16.msra.mxu0 0
  %140 = vmatpush.bf16.msra.mxu0 %v127
  %141 = vmatpush.bf16.msra.mxu0 %v126
  %142 = vmatpush.bf16.msra.mxu0 %v125
  %143 = vmatpush.bf16.msra.mxu0 %v124
  %144 = vmatmul.bf16.gmra.mxu0 %v134
  %v145 = vpop.f32.mrf.mxu0
  %v146 = vadd.f32 0.0, %v145
  %v147 = vpop.f32.mrf.mxu0
  %v148 = vadd.f32 0.0, %v147
  %149 = vdwg.mxu0
  %v150 = vadd.f32 %v97, %v146
  %v151 = vadd.f32 %v98, %v148
  %152 = vst.msk [vmem:[#allocation2] sm:$0xff] %vm61, %v150
  %153 = vst.msk [vmem:[#allocation2 + $0x8] sm:$0xff] %vm61, %v151
  // Predicated region
  $region34: #{bert_classifier_forward.13} parent=0 // pred_check
    %p154 = pneg %p27
  $region35: #{bert_classifier_forward.13} parent=0 // pred_check_branch
    %156 = sbr.rel (%p154) target = $region37
  $region36: #{bert_classifier_forward.13} parent=0 // pred_region
    %v157 = vld [vmem:[#allocation2] sm:$0xff]
    %v158 = vld [vmem:[#allocation2 + $0x8] sm:$0xff]
    %v159 = vld [vmem:[%s4] sm:$0x1]
    %v161 = vperm.slane %v159, 0
    %v163 = vadd.f32 %v157, %v161
    %v164 = vadd.f32 %v158, %v161
    %v165 = vld [vmem:[%s0] sm:$0xf]
    %v166 = vld [vmem:[%s0 + $0x4] sm:$0xf]
    %v167 = vunpack.c.l.bf16 %v165
    %v168 = vunpack.c.l.bf16 %v166
    %v169 = vadd.f32 %v163, %v167
    %v170 = vadd.f32 %v164, %v168
    %v171 = vld [vmem:[%s5] sm:$0x1]
    %v172 = vld [vmem:[%s6] sm:$0x1]
    %v173 = vsel %vm61, %v169, 0.0
    %174 = vadd.xlane.f32.xlu0 %v173
    %v175 = vpop.xlane.xlu0 %174
    %v176 = vsel %vm61, %v170, 0.0
    %177 = vadd.xlane.f32.xlu0 %v176
    %v178 = vpop.xlane.xlu0 %177
    %v179 = vrcp.pop 32.0
    %v180 = vmul.f32 32.0, %v179
    %v181 = vsub.f32 1.0, %v180
    %v182 = vmul.f32 %v179, %v181
    %v183 = vadd.f32 %v179, %v182
    %vm184 = vweird.f32 %v179
    %v185 = vsel %vm184, %v179, %v183
    %v186 = vmul.f32 %v175, %v185
    %v187 = vmul.f32 %v178, %v185
    %v188 = vsub.f32 %v169, %v186
    %v189 = vsub.f32 %v170, %v187
    %v190 = vmul.f32 %v188, %v188
    %v191 = vmul.f32 %v189, %v189
    %v192 = vsel %vm61, %v190, 0.0
    %193 = vadd.xlane.f32.xlu0 %v192
    %v194 = vpop.xlane.xlu0 %193
    %v195 = vsel %vm61, %v191, 0.0
    %196 = vadd.xlane.f32.xlu0 %v195
    %v197 = vpop.xlane.xlu0 %196
    %v198 = vmul.f32 %v194, %v185
    %v199 = vmul.f32 %v197, %v185
    %v200 = vadd.f32 %v198, 1e-12
    %v201 = vadd.f32 %v199, 1e-12
    %v202 = vrsqrt.pop %v200
    %v203 = vmul.f32 %v202, %v200
    %v204 = vmul.f32 %v203, %v202
    %v205 = vmul.f32 0.5, %v204
    %v206 = vsub.f32 1.5, %v205
    %v207 = vmul.f32 %v202, %v206
    %vm208 = vweird.f32 %v200
    %vm209 = vweird.f32 %v202
    %vm210 = vmor %vm208, %vm209
    %v211 = vsel %vm210, %v202, %v207
    %v212 = vrsqrt.pop %v201
    %v213 = vmul.f32 %v212, %v201
    %v214 = vmul.f32 %v213, %v212
    %v215 = vmul.f32 0.5, %v214
    %v216 = vsub.f32 1.5, %v215
    %v217 = vmul.f32 %v212, %v216
    %vm218 = vweird.f32 %v201
    %vm219 = vweird.f32 %v212
    %vm220 = vmor %vm218, %vm219
    %v221 = vsel %vm220, %v212, %v217
    %v222 = vmul.f32 %v188, %v211
    %v223 = vmul.f32 %v189, %v221
    %v225 = vperm.slane %v171, 0
    %v227 = vmul.f32 %v222, %v225
    %v228 = vmul.f32 %v223, %v225
    %v230 = vperm.slane %v172, 0
    %v232 = vadd.f32 %v227, %v230
    %v233 = vadd.f32 %v228, %v230
    %v234 = vpack.c.bf16 %v232, %v232
    %v235 = vpack.c.bf16 %v233, %v233
    %vm236 = vcmask 257024
    %237 = vst.msk [vmem:[%s7] sm:$0xf] %vm236, %v234
    %238 = vst.msk [vmem:[%s7 + $0x4] sm:$0xf] %vm236, %v235
  $region37: #{bert_classifier_forward.13} parent=0 // pred_fallthru
    _
  // Predicated region
  $region38: #{bert_classifier_forward.13} parent=0 // pred_check
    _
  $region39: #{bert_classifier_forward.13} parent=0 // pred_check_branch
    %240 = sbr.rel (0) target = $region41
  $region40: #{bert_classifier_forward.13} parent=0 // pred_region
    _
  $region41: #{bert_classifier_forward.13} parent=0 // pred_fallthru
    _
  // Predicated region
  $region42: #{bert_classifier_forward.13} parent=0 // pred_check
    _
  $region43: #{bert_classifier_forward.13} parent=0 // pred_check_branch
    %242 = sbr.rel (0) target = $region45
  $region44: #{bert_classifier_forward.13} parent=0 // pred_region
    _
  $region45: #{bert_classifier_forward.13} parent=0 // pred_fallthru
    _

</llo_original>
